<compile_context>
chip_gen: v7x
topology: tpu7x:2x2x1
jax: 0.10.0
libtpu: 0.0.40
codegen_flags: <defaults>
</compile_context>

<pallas_src>
import jax
import jax.numpy as jnp
from jax.experimental import pallas as pl
from jax.experimental.pallas import tpu as pltpu

INPUT_SIZE = 28
HIDDEN = 64
OUT = 10

# Padded kernel-internal sizes (layout plumbing only; zeros everywhere else).
I_PAD = 128      # lane-pad input features
H_PAD = 128      # each gate / the hidden state occupies a full 128-lane slot
OUT_PAD = 128    # lane-dense output store
B_SUB = 8        # fp32 sublane group

# PyTorch LSTM gate order is [i, f, g, o]; kernel uses [i, f, o, g] so the
# three sigmoid gates are contiguous and tanh gets the last slot.
GATE_PERM = (0, 1, 3, 2)


def _round_up(n, m):
    return (n + m - 1) // m * m


def lstm_kernel(x_ref, wih_ref, whh_ref, b_ref, wout_ref, bout_ref,
                out_ref, gin_sc):
    """Single-invocation LSTM; everything resident in VMEM.

    x_ref    : (T*B, I_PAD)       bf16, time-major, batch/lane padded input
    wih_ref  : (I_PAD, 4*H_PAD)   bf16 input->gates weights (gate order i,f,o,g)
    whh_ref  : (H_PAD, 4*H_PAD)   bf16 hidden->gates weights
    b_ref    : (1, 4*H_PAD)       f32  combined b_ih + b_hh
    wout_ref : (H_PAD, OUT_PAD)   bf16 final linear layer
    bout_ref : (1, OUT_PAD)       f32
    out_ref  : (B, OUT_PAD)       f32  lane-dense output block
    gin_sc   : (T*B, 4*H_PAD)     f32  hoisted x@Wih + bias, all timesteps
    """
    B = out_ref.shape[0]
    T = gin_sc.shape[0] // B

    # Hoisted input projection: one well-shaped bf16 MXU matmul for all
    # timesteps (f32 accumulate), bias folded in.
    gin_sc[...] = (jnp.dot(x_ref[...], wih_ref[...],
                           preferred_element_type=jnp.float32) + b_ref[...])

    h0 = jnp.zeros((B, H_PAD), jnp.float32)
    c0 = jnp.zeros((B, H_PAD), jnp.float32)

    def step(t, carry):
        h, c = carry                                # vreg-resident, no VMEM trip
        row = pl.multiple_of(t * B, B)              # sublane-aligned slice start
        gates = (gin_sc[pl.ds(row, B), :]
                 + jnp.dot(h.astype(whh_ref.dtype), whh_ref[...],
                           preferred_element_type=jnp.float32))
        # Gate slots [i, f, o, g]: one sigmoid over the first three slots,
        # one tanh over the last.
        sig = jax.nn.sigmoid(gates[:, 0:3 * H_PAD])
        i_g = sig[:, 0 * H_PAD:1 * H_PAD]
        f_g = sig[:, 1 * H_PAD:2 * H_PAD]
        o_g = sig[:, 2 * H_PAD:3 * H_PAD]
        g_g = jnp.tanh(gates[:, 3 * H_PAD:4 * H_PAD])
        c_new = f_g * c + i_g * g_g
        h_new = o_g * jnp.tanh(c_new)
        return (h_new, c_new)

    # Time is inherently serial: short unrolled in-kernel loop, h/c as carries.
    # (At T=8 full unroll is fine; bound the unroll if T grows large.)
    h_last, _ = jax.lax.fori_loop(0, T, step, (h0, c0), unroll=True)

    # Final linear layer on the last hidden state; unmasked lane-dense store.
    out_ref[...] = (jnp.dot(h_last.astype(wout_ref.dtype), wout_ref[...],
                            preferred_element_type=jnp.float32) + bout_ref[...])


def rnn_forward(x, params):
    B, T, I = x.shape
    B_pad = _round_up(max(B, B_SUB), B_SUB)

    # --- wrapper-side layout plumbing (zero padding / reorder / cast only) ---
    def pad_gate_cols(w):          # (rows, 4*HIDDEN) -> (rows, 4*H_PAD), [i,f,o,g]
        r = w.shape[0]
        w4 = w.reshape(r, 4, HIDDEN)[:, jnp.array(GATE_PERM), :]
        return jnp.pad(w4, ((0, 0), (0, 0), (0, H_PAD - HIDDEN))).reshape(r, 4 * H_PAD)

    wih_p = jnp.pad(pad_gate_cols(params["w_ih"].T),
                    ((0, I_PAD - I), (0, 0))).astype(jnp.bfloat16)
    whh_p = jnp.pad(pad_gate_cols(params["w_hh"].T),
                    ((0, H_PAD - HIDDEN), (0, 0))).astype(jnp.bfloat16)
    bias_p = pad_gate_cols((params["b_ih"] + params["b_hh"]).reshape(1, 4 * HIDDEN))
    wout_p = jnp.pad(params["w_out"].T,
                     ((0, H_PAD - HIDDEN), (0, OUT_PAD - OUT))).astype(jnp.bfloat16)
    bout_p = jnp.pad(params["b_out"].reshape(1, OUT), ((0, 0), (0, OUT_PAD - OUT)))

    # x: (B, T, I) -> time-major (T, B_pad, I_PAD) -> flat (T*B_pad, I_PAD) so
    # the hoisted input projection is a single MXU matmul.
    x_tbi = jnp.transpose(x, (1, 0, 2))
    x_p = jnp.pad(x_tbi, ((0, 0), (0, B_pad - B), (0, I_PAD - I)))
    x_p = x_p.reshape(T * B_pad, I_PAD).astype(jnp.bfloat16)

    out_pad = pl.pallas_call(
        lstm_kernel,
        out_shape=jax.ShapeDtypeStruct((B_pad, OUT_PAD), jnp.float32),
        in_specs=[pl.BlockSpec(memory_space=pltpu.MemorySpace.VMEM)
                  for _ in range(6)],
        out_specs=pl.BlockSpec(memory_space=pltpu.MemorySpace.VMEM),
        scratch_shapes=[
            pltpu.VMEM((T * B_pad, 4 * H_PAD), jnp.float32),   # x@Wih + b, all t
        ],
    )(x_p, wih_p, whh_p, bias_p, wout_p, bout_p)
    return out_pad[:B, :OUT]


def _ref_forward(x, params):
    """Pure-JAX f32 reference matching PyTorch nn.LSTM + nn.Linear semantics."""
    B, T, I = x.shape

    def step(carry, x_t):
        h, c = carry
        gates = (x_t @ params["w_ih"].T + params["b_ih"]
                 + h @ params["w_hh"].T + params["b_hh"])
        i_g = jax.nn.sigmoid(gates[:, 0 * HIDDEN:1 * HIDDEN])
        f_g = jax.nn.sigmoid(gates[:, 1 * HIDDEN:2 * HIDDEN])
        g_g = jnp.tanh(gates[:, 2 * HIDDEN:3 * HIDDEN])
        o_g = jax.nn.sigmoid(gates[:, 3 * HIDDEN:4 * HIDDEN])
        c = f_g * c + i_g * g_g
        h = o_g * jnp.tanh(c)
        return (h, c), h

    h0 = jnp.zeros((B, HIDDEN), jnp.float32)
    c0 = jnp.zeros((B, HIDDEN), jnp.float32)
    (h_last, _), _ = jax.lax.scan(step, (h0, c0), jnp.transpose(x, (1, 0, 2)))
    return h_last @ params["w_out"].T + params["b_out"]


def init_params(key):
    k = 1.0 / jnp.sqrt(jnp.float32(HIDDEN))
    ks = jax.random.split(key, 6)
    u = lambda kk, shape: jax.random.uniform(kk, shape, jnp.float32, -k, k)
    return {
        "w_ih": u(ks[0], (4 * HIDDEN, INPUT_SIZE)),
        "w_hh": u(ks[1], (4 * HIDDEN, HIDDEN)),
        "b_ih": u(ks[2], (4 * HIDDEN,)),
        "b_hh": u(ks[3], (4 * HIDDEN,)),
        "w_out": u(ks[4], (OUT, HIDDEN)),
        "b_out": u(ks[5], (OUT,)),
    }


if __name__ == "__main__":
    key = jax.random.PRNGKey(0)
    kx, kp = jax.random.split(key)
    B, T = 2, 8
    x = jax.random.normal(kx, (B, T, INPUT_SIZE), jnp.float32)
    params = init_params(kp)

    out = jax.jit(rnn_forward)(x, params)
    out = jax.block_until_ready(out)

    ref = _ref_forward(x, params)
    assert out.shape == (B, OUT)
    # bf16 MXU operands vs. f32 reference -> relaxed tolerance.
    assert jnp.allclose(out, ref, atol=2e-2, rtol=2e-2), "mismatch vs reference"
    print("KERNEL_OK")
</pallas_src>

<mosaic_0001>
module attributes {stable_mosaic.version = 11 : i64} {
  func.func @lstm_kernel(%arg0: memref<64x128xbf16, #tpu.memory_space<vmem>>, %arg1: memref<128x512xbf16, #tpu.memory_space<vmem>>, %arg2: memref<128x512xbf16, #tpu.memory_space<vmem>>, %arg3: memref<1x512xf32, #tpu.memory_space<vmem>>, %arg4: memref<128x128xbf16, #tpu.memory_space<vmem>>, %arg5: memref<1x128xf32, #tpu.memory_space<vmem>>, %arg6: memref<8x128xf32, #tpu.memory_space<vmem>>, %arg7: memref<64x512xf32, #tpu.memory_space<vmem>>) attributes {dimension_semantics = [], scalar_prefetch = 0 : i64, scratch_operands = 1 : i64, tpu.core_type = #tpu.core_type<tc>} {
    %c0 = arith.constant 0 : index
    %c0_0 = arith.constant 0 : index
    %0 = vector.load %arg0[%c0, %c0_0] : memref<64x128xbf16, #tpu.memory_space<vmem>>, vector<64x128xbf16>
    %c0_1 = arith.constant 0 : index
    %c0_2 = arith.constant 0 : index
    %1 = vector.load %arg1[%c0_1, %c0_2] : memref<128x512xbf16, #tpu.memory_space<vmem>>, vector<128x512xbf16>
    %cst = arith.constant dense<0.000000e+00> : vector<64x512xf32>
    %2 = tpu.matmul %0, %1, %cst {dimension_numbers = #tpu.dot_dimension_numbers<[1], [0], [0], [1], [0, 0, 1, 1], [], []>} : vector<64x128xbf16>, vector<128x512xbf16>, vector<64x512xf32> -> vector<64x512xf32>
    %c0_3 = arith.constant 0 : index
    %c0_4 = arith.constant 0 : index
    %3 = vector.load %arg3[%c0_3, %c0_4] : memref<1x512xf32, #tpu.memory_space<vmem>>, vector<1x512xf32>
    %4 = vector.broadcast %3 : vector<1x512xf32> to vector<64x512xf32>
    %5 = arith.addf %2, %4 : vector<64x512xf32>
    %c0_5 = arith.constant 0 : index
    %c0_6 = arith.constant 0 : index
    %6 = vector.load %arg7[%c0_5, %c0_6] : memref<64x512xf32, #tpu.memory_space<vmem>>, vector<64x512xf32>
    tpu.vector_store %arg7[%c0_5, %c0_6], %5 {strides = array<i32>} : memref<64x512xf32, #tpu.memory_space<vmem>>, vector<64x512xf32>,
    %cst_7 = arith.constant 0.000000e+00 : f32
    %7 = vector.broadcast %cst_7 : f32 to vector<8x128xf32>
    %cst_8 = arith.constant 0.000000e+00 : f32
    %8 = vector.broadcast %cst_8 : f32 to vector<8x128xf32>
    %c0_i32 = arith.constant 0 : i32
    %c8_i32 = arith.constant 8 : i32
    %9 = arith.muli %c0_i32, %c8_i32 : i32
    %10 = tpu.assume_multiple %9, 8 : i32
    %11 = arith.index_cast %10 : i32 to index
    %c0_9 = arith.constant 0 : index
    %12 = vector.load %arg7[%11, %c0_9] : memref<64x512xf32, #tpu.memory_space<vmem>>, vector<8x512xf32>
    %13 = arith.truncf %7 : vector<8x128xf32> to vector<8x128xbf16>
    %c0_10 = arith.constant 0 : index
    %c0_11 = arith.constant 0 : index
    %14 = vector.load %arg2[%c0_10, %c0_11] : memref<128x512xbf16, #tpu.memory_space<vmem>>, vector<128x512xbf16>
    %cst_12 = arith.constant dense<0.000000e+00> : vector<8x512xf32>
    %15 = tpu.matmul %13, %14, %cst_12 {dimension_numbers = #tpu.dot_dimension_numbers<[1], [0], [0], [1], [0, 0, 1, 1], [], []>} : vector<8x128xbf16>, vector<128x512xbf16>, vector<8x512xf32> -> vector<8x512xf32>
    %16 = arith.addf %12, %15 : vector<8x512xf32>
    %17 = vector.extract_strided_slice %16 {offsets = [0, 0], sizes = [8, 384], strides = [1, 1]} : vector<8x512xf32> to vector<8x384xf32>
    %18 = arith.negf %17 : vector<8x384xf32>
    %19 = math.exp %18 : vector<8x384xf32>
    %cst_13 = arith.constant 1.000000e+00 : f32
    %20 = vector.broadcast %cst_13 : f32 to vector<8x384xf32>
    %21 = arith.addf %20, %19 : vector<8x384xf32>
    %22 = arith.divf %20, %21 : vector<8x384xf32>
    %23 = vector.extract_strided_slice %22 {offsets = [0, 0], sizes = [8, 128], strides = [1, 1]} : vector<8x384xf32> to vector<8x128xf32>
    %24 = vector.extract_strided_slice %22 {offsets = [0, 128], sizes = [8, 128], strides = [1, 1]} : vector<8x384xf32> to vector<8x128xf32>
    %25 = vector.extract_strided_slice %22 {offsets = [0, 256], sizes = [8, 128], strides = [1, 1]} : vector<8x384xf32> to vector<8x128xf32>
    %26 = vector.extract_strided_slice %16 {offsets = [0, 384], sizes = [8, 128], strides = [1, 1]} : vector<8x512xf32> to vector<8x128xf32>
    %27 = math.tanh %26 : vector<8x128xf32>
    %28 = arith.mulf %24, %8 : vector<8x128xf32>
    %29 = arith.mulf %23, %27 : vector<8x128xf32>
    %30 = arith.addf %28, %29 : vector<8x128xf32>
    %31 = math.tanh %30 : vector<8x128xf32>
    %32 = arith.mulf %25, %31 : vector<8x128xf32>
    %c1_i32 = arith.constant 1 : i32
    %c8_i32_14 = arith.constant 8 : i32
    %33 = arith.muli %c1_i32, %c8_i32_14 : i32
    %34 = tpu.assume_multiple %33, 8 : i32
    %35 = arith.index_cast %34 : i32 to index
    %c0_15 = arith.constant 0 : index
    %36 = vector.load %arg7[%35, %c0_15] : memref<64x512xf32, #tpu.memory_space<vmem>>, vector<8x512xf32>
    %37 = arith.truncf %32 : vector<8x128xf32> to vector<8x128xbf16>
    %c0_16 = arith.constant 0 : index
    %c0_17 = arith.constant 0 : index
    %38 = vector.load %arg2[%c0_16, %c0_17] : memref<128x512xbf16, #tpu.memory_space<vmem>>, vector<128x512xbf16>
    %cst_18 = arith.constant dense<0.000000e+00> : vector<8x512xf32>
    %39 = tpu.matmul %37, %38, %cst_18 {dimension_numbers = #tpu.dot_dimension_numbers<[1], [0], [0], [1], [0, 0, 1, 1], [], []>} : vector<8x128xbf16>, vector<128x512xbf16>, vector<8x512xf32> -> vector<8x512xf32>
    %40 = arith.addf %36, %39 : vector<8x512xf32>
    %41 = vector.extract_strided_slice %40 {offsets = [0, 0], sizes = [8, 384], strides = [1, 1]} : vector<8x512xf32> to vector<8x384xf32>
    %42 = arith.negf %41 : vector<8x384xf32>
    %43 = math.exp %42 : vector<8x384xf32>
    %cst_19 = arith.constant 1.000000e+00 : f32
    %44 = vector.broadcast %cst_19 : f32 to vector<8x384xf32>
    %45 = arith.addf %44, %43 : vector<8x384xf32>
    %46 = arith.divf %44, %45 : vector<8x384xf32>
    %47 = vector.extract_strided_slice %46 {offsets = [0, 0], sizes = [8, 128], strides = [1, 1]} : vector<8x384xf32> to vector<8x128xf32>
    %48 = vector.extract_strided_slice %46 {offsets = [0, 128], sizes = [8, 128], strides = [1, 1]} : vector<8x384xf32> to vector<8x128xf32>
    %49 = vector.extract_strided_slice %46 {offsets = [0, 256], sizes = [8, 128], strides = [1, 1]} : vector<8x384xf32> to vector<8x128xf32>
    %50 = vector.extract_strided_slice %40 {offsets = [0, 384], sizes = [8, 128], strides = [1, 1]} : vector<8x512xf32> to vector<8x128xf32>
    %51 = math.tanh %50 : vector<8x128xf32>
    %52 = arith.mulf %48, %30 : vector<8x128xf32>
    %53 = arith.mulf %47, %51 : vector<8x128xf32>
    %54 = arith.addf %52, %53 : vector<8x128xf32>
    %55 = math.tanh %54 : vector<8x128xf32>
    %56 = arith.mulf %49, %55 : vector<8x128xf32>
    %c2_i32 = arith.constant 2 : i32
    %c8_i32_20 = arith.constant 8 : i32
    %57 = arith.muli %c2_i32, %c8_i32_20 : i32
    %58 = tpu.assume_multiple %57, 8 : i32
    %59 = arith.index_cast %58 : i32 to index
    %c0_21 = arith.constant 0 : index
    %60 = vector.load %arg7[%59, %c0_21] : memref<64x512xf32, #tpu.memory_space<vmem>>, vector<8x512xf32>
    %61 = arith.truncf %56 : vector<8x128xf32> to vector<8x128xbf16>
    %c0_22 = arith.constant 0 : index
    %c0_23 = arith.constant 0 : index
    %62 = vector.load %arg2[%c0_22, %c0_23] : memref<128x512xbf16, #tpu.memory_space<vmem>>, vector<128x512xbf16>
    %cst_24 = arith.constant dense<0.000000e+00> : vector<8x512xf32>
    %63 = tpu.matmul %61, %62, %cst_24 {dimension_numbers = #tpu.dot_dimension_numbers<[1], [0], [0], [1], [0, 0, 1, 1], [], []>} : vector<8x128xbf16>, vector<128x512xbf16>, vector<8x512xf32> -> vector<8x512xf32>
    %64 = arith.addf %60, %63 : vector<8x512xf32>
    %65 = vector.extract_strided_slice %64 {offsets = [0, 0], sizes = [8, 384], strides = [1, 1]} : vector<8x512xf32> to vector<8x384xf32>
    %66 = arith.negf %65 : vector<8x384xf32>
    %67 = math.exp %66 : vector<8x384xf32>
    %cst_25 = arith.constant 1.000000e+00 : f32
    %68 = vector.broadcast %cst_25 : f32 to vector<8x384xf32>
    %69 = arith.addf %68, %67 : vector<8x384xf32>
    %70 = arith.divf %68, %69 : vector<8x384xf32>
    %71 = vector.extract_strided_slice %70 {offsets = [0, 0], sizes = [8, 128], strides = [1, 1]} : vector<8x384xf32> to vector<8x128xf32>
    %72 = vector.extract_strided_slice %70 {offsets = [0, 128], sizes = [8, 128], strides = [1, 1]} : vector<8x384xf32> to vector<8x128xf32>
    %73 = vector.extract_strided_slice %70 {offsets = [0, 256], sizes = [8, 128], strides = [1, 1]} : vector<8x384xf32> to vector<8x128xf32>
    %74 = vector.extract_strided_slice %64 {offsets = [0, 384], sizes = [8, 128], strides = [1, 1]} : vector<8x512xf32> to vector<8x128xf32>
    %75 = math.tanh %74 : vector<8x128xf32>
    %76 = arith.mulf %72, %54 : vector<8x128xf32>
    %77 = arith.mulf %71, %75 : vector<8x128xf32>
    %78 = arith.addf %76, %77 : vector<8x128xf32>
    %79 = math.tanh %78 : vector<8x128xf32>
    %80 = arith.mulf %73, %79 : vector<8x128xf32>
    %c3_i32 = arith.constant 3 : i32
    %c8_i32_26 = arith.constant 8 : i32
    %81 = arith.muli %c3_i32, %c8_i32_26 : i32
    %82 = tpu.assume_multiple %81, 8 : i32
    %83 = arith.index_cast %82 : i32 to index
    %c0_27 = arith.constant 0 : index
    %84 = vector.load %arg7[%83, %c0_27] : memref<64x512xf32, #tpu.memory_space<vmem>>, vector<8x512xf32>
    %85 = arith.truncf %80 : vector<8x128xf32> to vector<8x128xbf16>
    %c0_28 = arith.constant 0 : index
    %c0_29 = arith.constant 0 : index
    %86 = vector.load %arg2[%c0_28, %c0_29] : memref<128x512xbf16, #tpu.memory_space<vmem>>, vector<128x512xbf16>
    %cst_30 = arith.constant dense<0.000000e+00> : vector<8x512xf32>
    %87 = tpu.matmul %85, %86, %cst_30 {dimension_numbers = #tpu.dot_dimension_numbers<[1], [0], [0], [1], [0, 0, 1, 1], [], []>} : vector<8x128xbf16>, vector<128x512xbf16>, vector<8x512xf32> -> vector<8x512xf32>
    %88 = arith.addf %84, %87 : vector<8x512xf32>
    %89 = vector.extract_strided_slice %88 {offsets = [0, 0], sizes = [8, 384], strides = [1, 1]} : vector<8x512xf32> to vector<8x384xf32>
    %90 = arith.negf %89 : vector<8x384xf32>
    %91 = math.exp %90 : vector<8x384xf32>
    %cst_31 = arith.constant 1.000000e+00 : f32
    %92 = vector.broadcast %cst_31 : f32 to vector<8x384xf32>
    %93 = arith.addf %92, %91 : vector<8x384xf32>
    %94 = arith.divf %92, %93 : vector<8x384xf32>
    %95 = vector.extract_strided_slice %94 {offsets = [0, 0], sizes = [8, 128], strides = [1, 1]} : vector<8x384xf32> to vector<8x128xf32>
    %96 = vector.extract_strided_slice %94 {offsets = [0, 128], sizes = [8, 128], strides = [1, 1]} : vector<8x384xf32> to vector<8x128xf32>
    %97 = vector.extract_strided_slice %94 {offsets = [0, 256], sizes = [8, 128], strides = [1, 1]} : vector<8x384xf32> to vector<8x128xf32>
    %98 = vector.extract_strided_slice %88 {offsets = [0, 384], sizes = [8, 128], strides = [1, 1]} : vector<8x512xf32> to vector<8x128xf32>
    %99 = math.tanh %98 : vector<8x128xf32>
    %100 = arith.mulf %96, %78 : vector<8x128xf32>
    %101 = arith.mulf %95, %99 : vector<8x128xf32>
    %102 = arith.addf %100, %101 : vector<8x128xf32>
    %103 = math.tanh %102 : vector<8x128xf32>
    %104 = arith.mulf %97, %103 : vector<8x128xf32>
    %c4_i32 = arith.constant 4 : i32
    %c8_i32_32 = arith.constant 8 : i32
    %105 = arith.muli %c4_i32, %c8_i32_32 : i32
    %106 = tpu.assume_multiple %105, 8 : i32
    %107 = arith.index_cast %106 : i32 to index
    %c0_33 = arith.constant 0 : index
    %108 = vector.load %arg7[%107, %c0_33] : memref<64x512xf32, #tpu.memory_space<vmem>>, vector<8x512xf32>
    %109 = arith.truncf %104 : vector<8x128xf32> to vector<8x128xbf16>
    %c0_34 = arith.constant 0 : index
    %c0_35 = arith.constant 0 : index
    %110 = vector.load %arg2[%c0_34, %c0_35] : memref<128x512xbf16, #tpu.memory_space<vmem>>, vector<128x512xbf16>
    %cst_36 = arith.constant dense<0.000000e+00> : vector<8x512xf32>
    %111 = tpu.matmul %109, %110, %cst_36 {dimension_numbers = #tpu.dot_dimension_numbers<[1], [0], [0], [1], [0, 0, 1, 1], [], []>} : vector<8x128xbf16>, vector<128x512xbf16>, vector<8x512xf32> -> vector<8x512xf32>
    %112 = arith.addf %108, %111 : vector<8x512xf32>
    %113 = vector.extract_strided_slice %112 {offsets = [0, 0], sizes = [8, 384], strides = [1, 1]} : vector<8x512xf32> to vector<8x384xf32>
    %114 = arith.negf %113 : vector<8x384xf32>
    %115 = math.exp %114 : vector<8x384xf32>
    %cst_37 = arith.constant 1.000000e+00 : f32
    %116 = vector.broadcast %cst_37 : f32 to vector<8x384xf32>
    %117 = arith.addf %116, %115 : vector<8x384xf32>
    %118 = arith.divf %116, %117 : vector<8x384xf32>
    %119 = vector.extract_strided_slice %118 {offsets = [0, 0], sizes = [8, 128], strides = [1, 1]} : vector<8x384xf32> to vector<8x128xf32>
    %120 = vector.extract_strided_slice %118 {offsets = [0, 128], sizes = [8, 128], strides = [1, 1]} : vector<8x384xf32> to vector<8x128xf32>
    %121 = vector.extract_strided_slice %118 {offsets = [0, 256], sizes = [8, 128], strides = [1, 1]} : vector<8x384xf32> to vector<8x128xf32>
    %122 = vector.extract_strided_slice %112 {offsets = [0, 384], sizes = [8, 128], strides = [1, 1]} : vector<8x512xf32> to vector<8x128xf32>
    %123 = math.tanh %122 : vector<8x128xf32>
    %124 = arith.mulf %120, %102 : vector<8x128xf32>
    %125 = arith.mulf %119, %123 : vector<8x128xf32>
    %126 = arith.addf %124, %125 : vector<8x128xf32>
    %127 = math.tanh %126 : vector<8x128xf32>
    %128 = arith.mulf %121, %127 : vector<8x128xf32>
    %c5_i32 = arith.constant 5 : i32
    %c8_i32_38 = arith.constant 8 : i32
    %129 = arith.muli %c5_i32, %c8_i32_38 : i32
    %130 = tpu.assume_multiple %129, 8 : i32
    %131 = arith.index_cast %130 : i32 to index
    %c0_39 = arith.constant 0 : index
    %132 = vector.load %arg7[%131, %c0_39] : memref<64x512xf32, #tpu.memory_space<vmem>>, vector<8x512xf32>
    %133 = arith.truncf %128 : vector<8x128xf32> to vector<8x128xbf16>
    %c0_40 = arith.constant 0 : index
    %c0_41 = arith.constant 0 : index
    %134 = vector.load %arg2[%c0_40, %c0_41] : memref<128x512xbf16, #tpu.memory_space<vmem>>, vector<128x512xbf16>
    %cst_42 = arith.constant dense<0.000000e+00> : vector<8x512xf32>
    %135 = tpu.matmul %133, %134, %cst_42 {dimension_numbers = #tpu.dot_dimension_numbers<[1], [0], [0], [1], [0, 0, 1, 1], [], []>} : vector<8x128xbf16>, vector<128x512xbf16>, vector<8x512xf32> -> vector<8x512xf32>
    %136 = arith.addf %132, %135 : vector<8x512xf32>
    %137 = vector.extract_strided_slice %136 {offsets = [0, 0], sizes = [8, 384], strides = [1, 1]} : vector<8x512xf32> to vector<8x384xf32>
    %138 = arith.negf %137 : vector<8x384xf32>
    %139 = math.exp %138 : vector<8x384xf32>
    %cst_43 = arith.constant 1.000000e+00 : f32
    %140 = vector.broadcast %cst_43 : f32 to vector<8x384xf32>
    %141 = arith.addf %140, %139 : vector<8x384xf32>
    %142 = arith.divf %140, %141 : vector<8x384xf32>
    %143 = vector.extract_strided_slice %142 {offsets = [0, 0], sizes = [8, 128], strides = [1, 1]} : vector<8x384xf32> to vector<8x128xf32>
    %144 = vector.extract_strided_slice %142 {offsets = [0, 128], sizes = [8, 128], strides = [1, 1]} : vector<8x384xf32> to vector<8x128xf32>
    %145 = vector.extract_strided_slice %142 {offsets = [0, 256], sizes = [8, 128], strides = [1, 1]} : vector<8x384xf32> to vector<8x128xf32>
    %146 = vector.extract_strided_slice %136 {offsets = [0, 384], sizes = [8, 128], strides = [1, 1]} : vector<8x512xf32> to vector<8x128xf32>
    %147 = math.tanh %146 : vector<8x128xf32>
    %148 = arith.mulf %144, %126 : vector<8x128xf32>
    %149 = arith.mulf %143, %147 : vector<8x128xf32>
    %150 = arith.addf %148, %149 : vector<8x128xf32>
    %151 = math.tanh %150 : vector<8x128xf32>
    %152 = arith.mulf %145, %151 : vector<8x128xf32>
    %c6_i32 = arith.constant 6 : i32
    %c8_i32_44 = arith.constant 8 : i32
    %153 = arith.muli %c6_i32, %c8_i32_44 : i32
    %154 = tpu.assume_multiple %153, 8 : i32
    %155 = arith.index_cast %154 : i32 to index
    %c0_45 = arith.constant 0 : index
    %156 = vector.load %arg7[%155, %c0_45] : memref<64x512xf32, #tpu.memory_space<vmem>>, vector<8x512xf32>
    %157 = arith.truncf %152 : vector<8x128xf32> to vector<8x128xbf16>
    %c0_46 = arith.constant 0 : index
    %c0_47 = arith.constant 0 : index
    %158 = vector.load %arg2[%c0_46, %c0_47] : memref<128x512xbf16, #tpu.memory_space<vmem>>, vector<128x512xbf16>
    %cst_48 = arith.constant dense<0.000000e+00> : vector<8x512xf32>
    %159 = tpu.matmul %157, %158, %cst_48 {dimension_numbers = #tpu.dot_dimension_numbers<[1], [0], [0], [1], [0, 0, 1, 1], [], []>} : vector<8x128xbf16>, vector<128x512xbf16>, vector<8x512xf32> -> vector<8x512xf32>
    %160 = arith.addf %156, %159 : vector<8x512xf32>
    %161 = vector.extract_strided_slice %160 {offsets = [0, 0], sizes = [8, 384], strides = [1, 1]} : vector<8x512xf32> to vector<8x384xf32>
    %162 = arith.negf %161 : vector<8x384xf32>
    %163 = math.exp %162 : vector<8x384xf32>
    %cst_49 = arith.constant 1.000000e+00 : f32
    %164 = vector.broadcast %cst_49 : f32 to vector<8x384xf32>
    %165 = arith.addf %164, %163 : vector<8x384xf32>
    %166 = arith.divf %164, %165 : vector<8x384xf32>
    %167 = vector.extract_strided_slice %166 {offsets = [0, 0], sizes = [8, 128], strides = [1, 1]} : vector<8x384xf32> to vector<8x128xf32>
    %168 = vector.extract_strided_slice %166 {offsets = [0, 128], sizes = [8, 128], strides = [1, 1]} : vector<8x384xf32> to vector<8x128xf32>
    %169 = vector.extract_strided_slice %166 {offsets = [0, 256], sizes = [8, 128], strides = [1, 1]} : vector<8x384xf32> to vector<8x128xf32>
    %170 = vector.extract_strided_slice %160 {offsets = [0, 384], sizes = [8, 128], strides = [1, 1]} : vector<8x512xf32> to vector<8x128xf32>
    %171 = math.tanh %170 : vector<8x128xf32>
    %172 = arith.mulf %168, %150 : vector<8x128xf32>
    %173 = arith.mulf %167, %171 : vector<8x128xf32>
    %174 = arith.addf %172, %173 : vector<8x128xf32>
    %175 = math.tanh %174 : vector<8x128xf32>
    %176 = arith.mulf %169, %175 : vector<8x128xf32>
    %c7_i32 = arith.constant 7 : i32
    %c8_i32_50 = arith.constant 8 : i32
    %177 = arith.muli %c7_i32, %c8_i32_50 : i32
    %178 = tpu.assume_multiple %177, 8 : i32
    %179 = arith.index_cast %178 : i32 to index
    %c0_51 = arith.constant 0 : index
    %180 = vector.load %arg7[%179, %c0_51] : memref<64x512xf32, #tpu.memory_space<vmem>>, vector<8x512xf32>
    %181 = arith.truncf %176 : vector<8x128xf32> to vector<8x128xbf16>
    %c0_52 = arith.constant 0 : index
    %c0_53 = arith.constant 0 : index
    %182 = vector.load %arg2[%c0_52, %c0_53] : memref<128x512xbf16, #tpu.memory_space<vmem>>, vector<128x512xbf16>
    %cst_54 = arith.constant dense<0.000000e+00> : vector<8x512xf32>
    %183 = tpu.matmul %181, %182, %cst_54 {dimension_numbers = #tpu.dot_dimension_numbers<[1], [0], [0], [1], [0, 0, 1, 1], [], []>} : vector<8x128xbf16>, vector<128x512xbf16>, vector<8x512xf32> -> vector<8x512xf32>
    %184 = arith.addf %180, %183 : vector<8x512xf32>
    %185 = vector.extract_strided_slice %184 {offsets = [0, 0], sizes = [8, 384], strides = [1, 1]} : vector<8x512xf32> to vector<8x384xf32>
    %186 = arith.negf %185 : vector<8x384xf32>
    %187 = math.exp %186 : vector<8x384xf32>
    %cst_55 = arith.constant 1.000000e+00 : f32
    %188 = vector.broadcast %cst_55 : f32 to vector<8x384xf32>
    %189 = arith.addf %188, %187 : vector<8x384xf32>
    %190 = arith.divf %188, %189 : vector<8x384xf32>
    %191 = vector.extract_strided_slice %190 {offsets = [0, 0], sizes = [8, 128], strides = [1, 1]} : vector<8x384xf32> to vector<8x128xf32>
    %192 = vector.extract_strided_slice %190 {offsets = [0, 128], sizes = [8, 128], strides = [1, 1]} : vector<8x384xf32> to vector<8x128xf32>
    %193 = vector.extract_strided_slice %190 {offsets = [0, 256], sizes = [8, 128], strides = [1, 1]} : vector<8x384xf32> to vector<8x128xf32>
    %194 = vector.extract_strided_slice %184 {offsets = [0, 384], sizes = [8, 128], strides = [1, 1]} : vector<8x512xf32> to vector<8x128xf32>
    %195 = math.tanh %194 : vector<8x128xf32>
    %196 = arith.mulf %192, %174 : vector<8x128xf32>
    %197 = arith.mulf %191, %195 : vector<8x128xf32>
    %198 = arith.addf %196, %197 : vector<8x128xf32>
    %199 = math.tanh %198 : vector<8x128xf32>
    %200 = arith.mulf %193, %199 : vector<8x128xf32>
    %c8_i32_56 = arith.constant 8 : i32
    %201 = arith.truncf %200 : vector<8x128xf32> to vector<8x128xbf16>
    %c0_57 = arith.constant 0 : index
    %c0_58 = arith.constant 0 : index
    %202 = vector.load %arg4[%c0_57, %c0_58] : memref<128x128xbf16, #tpu.memory_space<vmem>>, vector<128x128xbf16>
    %cst_59 = arith.constant dense<0.000000e+00> : vector<8x128xf32>
    %203 = tpu.matmul %201, %202, %cst_59 {dimension_numbers = #tpu.dot_dimension_numbers<[1], [0], [0], [1], [0, 0, 1, 1], [], []>} : vector<8x128xbf16>, vector<128x128xbf16>, vector<8x128xf32> -> vector<8x128xf32>
    %c0_60 = arith.constant 0 : index
    %c0_61 = arith.constant 0 : index
    %204 = vector.load %arg5[%c0_60, %c0_61] : memref<1x128xf32, #tpu.memory_space<vmem>>, vector<1x128xf32>
    %205 = vector.broadcast %204 : vector<1x128xf32> to vector<8x128xf32>
    %206 = arith.addf %203, %205 : vector<8x128xf32>
    %c0_62 = arith.constant 0 : index
    %c0_63 = arith.constant 0 : index
    %207 = vector.load %arg6[%c0_62, %c0_63] : memref<8x128xf32, #tpu.memory_space<vmem>>, vector<8x128xf32>
    tpu.vector_store %arg6[%c0_62, %c0_63], %206 {strides = array<i32>} : memref<8x128xf32, #tpu.memory_space<vmem>>, vector<8x128xf32>,
    return
  }
}

</mosaic_0001>

<llo_original>
// kernel: rnn_forward.1
$region0: #{rnn_forward.1}
  #allocation0 [shape = 'u32[]', space=smem, size = 0x4, offset = 0x4, fixed_abs, tag = 'smem constant byte address 0x4 - core index']
  #allocation1 [shape = 'u32[144,128]{1,0:T(1,128)}', space=vmem, size = 0x12000, scoped, tag = 'internal scratch']
  #allocation2 [shape = 'f32[64,512]{1,0:T(8,128)}', space=vmem, size = 0x20000, scoped, tag = 'scratch operand']
  %s0 = inlined_call_operand.vmem [shape: bf16[64,128], index: 0, kind: input, shape index: {}]
  %s1 = inlined_call_operand.vmem [shape: bf16[128,512], index: 1, kind: input, shape index: {}]
  %s2 = inlined_call_operand.vmem [shape: bf16[128,512], index: 2, kind: input, shape index: {}]
  %s3 = inlined_call_operand.vmem [shape: f32[1,512], index: 3, kind: input, shape index: {}]
  %s4 = inlined_call_operand.vmem [shape: bf16[128,128], index: 4, kind: input, shape index: {}]
  %s5 = inlined_call_operand.vmem [shape: f32[1,128], index: 5, kind: input, shape index: {}]
  %s6 = inlined_call_operand.vmem [shape: f32[8,128], index: 6, kind: output, shape index: {}]
  %s7 = sld [smem:[#allocation0]]
  $region34: #{rnn_forward.1} parent=0
    _
  %s9 = ssub.s32 1, %s7
  %s10 = scalar_select 0, %s9, %s7
  // Predicated region
  $region2: #{rnn_forward.1} parent=0 // pred_check
    _
  $region3: #{rnn_forward.1} parent=0 // pred_check_branch
    %12 = sbr.rel (0) target = $region5
  $region4: #{rnn_forward.1} parent=0 // pred_region
    _
  $region5: #{rnn_forward.1} parent=0 // pred_fallthru
    _
  // Predicated region
  $region6: #{rnn_forward.1} parent=0 // pred_check
    _
  $region7: #{rnn_forward.1} parent=0 // pred_check_branch
    %14 = sbr.rel (0) target = $region9
  $region8: #{rnn_forward.1} parent=0 // pred_region
    _
  $region9: #{rnn_forward.1} parent=0 // pred_fallthru
    _
  // Predicated region
  $region10: #{rnn_forward.1} parent=0 // pred_check
    _
  $region11: #{rnn_forward.1} parent=0 // pred_check_branch
    %16 = sbr.rel (0) target = $region13
  $region12: #{rnn_forward.1} parent=0 // pred_region
    _
  $region13: #{rnn_forward.1} parent=0 // pred_fallthru
    _
  // Predicated region
  $region14: #{rnn_forward.1} parent=0 // pred_check
    _
  $region15: #{rnn_forward.1} parent=0 // pred_check_branch
    %18 = sbr.rel (0) target = $region17
  $region16: #{rnn_forward.1} parent=0 // pred_region
    _
  $region17: #{rnn_forward.1} parent=0 // pred_fallthru
    _
  // Predicated region
  $region18: #{rnn_forward.1} parent=0 // pred_check
    _
  $region19: #{rnn_forward.1} parent=0 // pred_check_branch
    %20 = sbr.rel (0) target = $region21
  $region20: #{rnn_forward.1} parent=0 // pred_region
    _
  $region21: #{rnn_forward.1} parent=0 // pred_fallthru
    _
  // Predicated region
  $region22: #{rnn_forward.1} parent=0 // pred_check
    _
  $region23: #{rnn_forward.1} parent=0 // pred_check_branch
    %22 = sbr.rel (0) target = $region25
  $region24: #{rnn_forward.1} parent=0 // pred_region
    _
  $region25: #{rnn_forward.1} parent=0 // pred_fallthru
    _
  %v24 = vld [vmem:[%s0] sm:$0xf]
  %v25 = vld [vmem:[%s0 + $0x4] sm:$0xf]
  %v26 = vld [vmem:[%s0 + $0x8] sm:$0xf]
  %v27 = vld [vmem:[%s0 + $0xc] sm:$0xf]
  %v28 = vld [vmem:[%s0 + $0x10] sm:$0xf]
  %v29 = vld [vmem:[%s0 + $0x14] sm:$0xf]
  %v30 = vld [vmem:[%s0 + $0x18] sm:$0xf]
  %v31 = vld [vmem:[%s0 + $0x1c] sm:$0xf]
  %v32 = vld [vmem:[%s1] sm:$0xff]
  %v33 = vld [vmem:[%s1 + $0x8] sm:$0xff]
  %v34 = vld [vmem:[%s1 + $0x10] sm:$0xff]
  %v35 = vld [vmem:[%s1 + $0x18] sm:$0xff]
  %v36 = vld [vmem:[%s1 + $0x20] sm:$0xff]
  %v37 = vld [vmem:[%s1 + $0x28] sm:$0xff]
  %v38 = vld [vmem:[%s1 + $0x30] sm:$0xff]
  %v39 = vld [vmem:[%s1 + $0x38] sm:$0xff]
  %v40 = vld [vmem:[%s1 + $0x40] sm:$0xff]
  %v41 = vld [vmem:[%s1 + $0x48] sm:$0xff]
  %v42 = vld [vmem:[%s1 + $0x50] sm:$0xff]
  %v43 = vld [vmem:[%s1 + $0x58] sm:$0xff]
  %v44 = vld [vmem:[%s1 + $0x60] sm:$0xff]
  %v45 = vld [vmem:[%s1 + $0x68] sm:$0xff]
  %v46 = vld [vmem:[%s1 + $0x70] sm:$0xff]
  %v47 = vld [vmem:[%s1 + $0x78] sm:$0xff]
  %v48 = vld [vmem:[%s1 + $0x80] sm:$0xff]
  %v49 = vld [vmem:[%s1 + $0x88] sm:$0xff]
  %v50 = vld [vmem:[%s1 + $0x90] sm:$0xff]
  %v51 = vld [vmem:[%s1 + $0x98] sm:$0xff]
  %v52 = vld [vmem:[%s1 + $0xa0] sm:$0xff]
  %v53 = vld [vmem:[%s1 + $0xa8] sm:$0xff]
  %v54 = vld [vmem:[%s1 + $0xb0] sm:$0xff]
  %v55 = vld [vmem:[%s1 + $0xb8] sm:$0xff]
  %v56 = vld [vmem:[%s1 + $0xc0] sm:$0xff]
  %v57 = vld [vmem:[%s1 + $0xc8] sm:$0xff]
  %v58 = vld [vmem:[%s1 + $0xd0] sm:$0xff]
  %v59 = vld [vmem:[%s1 + $0xd8] sm:$0xff]
  %v60 = vld [vmem:[%s1 + $0xe0] sm:$0xff]
  %v61 = vld [vmem:[%s1 + $0xe8] sm:$0xff]
  %v62 = vld [vmem:[%s1 + $0xf0] sm:$0xff]
  %v63 = vld [vmem:[%s1 + $0xf8] sm:$0xff]
  %v64 = vld [vmem:[%s3] sm:$0xf]
  %v66 = vlaneseq
  %v67 = vshrl.u32 %v66, 7
  %v68 = vsub.s32 0, %v67
  %v69 = vrot.slane %v64, %v68
  %v70 = vlaneseq
  %v71 = vshrl.u32 %v70, 7
  %v72 = vsub.s32 1, %v71
  %v73 = vrot.slane %v64, %v72
  %v74 = vlaneseq
  %v75 = vshrl.u32 %v74, 7
  %v76 = vsub.s32 2, %v75
  %v77 = vrot.slane %v64, %v76
  %v78 = vlaneseq
  %v79 = vshrl.u32 %v78, 7
  %v80 = vsub.s32 3, %v79
  %v81 = vrot.slane %v64, %v80
  %v94 = vunpack.c.l.b16 %v24
  %v95 = vunpack.c.l.b16 %v25
  %v96 = vunpack.c.l.b16 %v26
  %v97 = vunpack.c.l.b16 %v27
  %v98 = vunpack.c.l.b16 %v28
  %v99 = vunpack.c.l.b16 %v29
  %v100 = vunpack.c.l.b16 %v30
  %v101 = vunpack.c.l.b16 %v31
  %v102 = vpack.c.b16 %v95, %v94
  %v103 = vpack.c.b16 %v97, %v96
  %v104 = vpack.c.b16 %v99, %v98
  %v105 = vpack.c.b16 %v101, %v100
  %v142 = vunpack.c.l.b16 %v32
  %v143 = vunpack.c.h.b16 %v32
  %v144 = vunpack.c.l.b16 %v33
  %v145 = vunpack.c.h.b16 %v33
  %v146 = vunpack.c.l.b16 %v34
  %v147 = vunpack.c.h.b16 %v34
  %v148 = vunpack.c.l.b16 %v35
  %v149 = vunpack.c.h.b16 %v35
  %v150 = vunpack.c.l.b16 %v36
  %v151 = vunpack.c.h.b16 %v36
  %v152 = vunpack.c.l.b16 %v37
  %v153 = vunpack.c.h.b16 %v37
  %v154 = vunpack.c.l.b16 %v38
  %v155 = vunpack.c.h.b16 %v38
  %v156 = vunpack.c.l.b16 %v39
  %v157 = vunpack.c.h.b16 %v39
  %v158 = vunpack.c.l.b16 %v40
  %v159 = vunpack.c.h.b16 %v40
  %v160 = vunpack.c.l.b16 %v41
  %v161 = vunpack.c.h.b16 %v41
  %v162 = vunpack.c.l.b16 %v42
  %v163 = vunpack.c.h.b16 %v42
  %v164 = vunpack.c.l.b16 %v43
  %v165 = vunpack.c.h.b16 %v43
  %v166 = vunpack.c.l.b16 %v44
  %v167 = vunpack.c.h.b16 %v44
  %v168 = vunpack.c.l.b16 %v45
  %v169 = vunpack.c.h.b16 %v45
  %v170 = vunpack.c.l.b16 %v46
  %v171 = vunpack.c.h.b16 %v46
  %v172 = vunpack.c.l.b16 %v47
  %v173 = vunpack.c.h.b16 %v47
  %v174 = vunpack.c.l.b16 %v48
  %v175 = vunpack.c.h.b16 %v48
  %v176 = vunpack.c.l.b16 %v49
  %v177 = vunpack.c.h.b16 %v49
  %v178 = vunpack.c.l.b16 %v50
  %v179 = vunpack.c.h.b16 %v50
  %v180 = vunpack.c.l.b16 %v51
  %v181 = vunpack.c.h.b16 %v51
  %v182 = vunpack.c.l.b16 %v52
  %v183 = vunpack.c.h.b16 %v52
  %v184 = vunpack.c.l.b16 %v53
  %v185 = vunpack.c.h.b16 %v53
  %v186 = vunpack.c.l.b16 %v54
  %v187 = vunpack.c.h.b16 %v54
  %v188 = vunpack.c.l.b16 %v55
  %v189 = vunpack.c.h.b16 %v55
  %v190 = vunpack.c.l.b16 %v56
  %v191 = vunpack.c.h.b16 %v56
  %v192 = vunpack.c.l.b16 %v57
  %v193 = vunpack.c.h.b16 %v57
  %v194 = vunpack.c.l.b16 %v58
  %v195 = vunpack.c.h.b16 %v58
  %v196 = vunpack.c.l.b16 %v59
  %v197 = vunpack.c.h.b16 %v59
  %v198 = vunpack.c.l.b16 %v60
  %v199 = vunpack.c.h.b16 %v60
  %v200 = vunpack.c.l.b16 %v61
  %v201 = vunpack.c.h.b16 %v61
  %v202 = vunpack.c.l.b16 %v62
  %v203 = vunpack.c.h.b16 %v62
  %v204 = vunpack.c.l.b16 %v63
  %v205 = vunpack.c.h.b16 %v63
  %v206 = vpack.c.b16 %v146, %v142
  %v207 = vpack.c.b16 %v147, %v143
  %v208 = vpack.c.b16 %v148, %v144
  %v209 = vpack.c.b16 %v149, %v145
  %v210 = vpack.c.b16 %v154, %v150
  %v211 = vpack.c.b16 %v155, %v151
  %v212 = vpack.c.b16 %v156, %v152
  %v213 = vpack.c.b16 %v157, %v153
  %v214 = vpack.c.b16 %v162, %v158
  %v215 = vpack.c.b16 %v163, %v159
  %v216 = vpack.c.b16 %v164, %v160
  %v217 = vpack.c.b16 %v165, %v161
  %v218 = vpack.c.b16 %v170, %v166
  %v219 = vpack.c.b16 %v171, %v167
  %v220 = vpack.c.b16 %v172, %v168
  %v221 = vpack.c.b16 %v173, %v169
  %v222 = vpack.c.b16 %v178, %v174
  %v223 = vpack.c.b16 %v179, %v175
  %v224 = vpack.c.b16 %v180, %v176
  %v225 = vpack.c.b16 %v181, %v177
  %v226 = vpack.c.b16 %v186, %v182
  %v227 = vpack.c.b16 %v187, %v183
  %v228 = vpack.c.b16 %v188, %v184
  %v229 = vpack.c.b16 %v189, %v185
  %v230 = vpack.c.b16 %v194, %v190
  %v231 = vpack.c.b16 %v195, %v191
  %v232 = vpack.c.b16 %v196, %v192
  %v233 = vpack.c.b16 %v197, %v193
  %v234 = vpack.c.b16 %v202, %v198
  %v235 = vpack.c.b16 %v203, %v199
  %v236 = vpack.c.b16 %v204, %v200
  %v237 = vpack.c.b16 %v205, %v201
  %270 = vmatprep.subr.bf16.mxu0 %v207
  %271 = vmatpush1.bf16.msra.mxu0 %v206
  %272 = vmatprep.subr.bf16.mxu0 %v211
  %273 = vmatpush1.bf16.msra.mxu0 %v210
  %274 = vmatprep.subr.bf16.mxu0 %v215
  %275 = vmatpush1.bf16.msra.mxu0 %v214
  %276 = vmatprep.subr.bf16.mxu0 %v219
  %277 = vmatpush1.bf16.msra.mxu0 %v218
  %278 = vmatprep.subr.bf16.mxu0 %v223
  %279 = vmatpush1.bf16.msra.mxu0 %v222
  %280 = vmatprep.subr.bf16.mxu0 %v227
  %281 = vmatpush1.bf16.msra.mxu0 %v226
  %282 = vmatprep.subr.bf16.mxu0 %v231
  %283 = vmatpush1.bf16.msra.mxu0 %v230
  %284 = vmatprep.subr.bf16.mxu0 %v235
  %285 = vmatpush1.bf16.msra.mxu0 %v234
  %286 = vmatprep.subr.bf16.mxu0 0
  %287 = vmatpush1.bf16.msra.mxu0 0
  %288 = vmatprep.subr.bf16.mxu0 0
  %289 = vmatpush1.bf16.msra.mxu0 0
  %290 = vmatprep.subr.bf16.mxu0 0
  %291 = vmatpush1.bf16.msra.mxu0 0
  %292 = vmatprep.subr.bf16.mxu0 0
  %293 = vmatpush1.bf16.msra.mxu0 0
  %294 = vmatprep.subr.bf16.mxu0 0
  %295 = vmatpush1.bf16.msra.mxu0 0
  %296 = vmatprep.subr.bf16.mxu0 0
  %297 = vmatpush1.bf16.msra.mxu0 0
  %298 = vmatprep.subr.bf16.mxu0 0
  %299 = vmatpush1.bf16.msra.mxu0 0
  %300 = vmatprep.subr.bf16.mxu0 0
  %301 = vmatpush1.bf16.msra.mxu0 0
  %302 = vmatprep.mubr.bf16.mxu0 0
  %303 = vmatmul.mubr.bf16.gmra.mrb[0].mxu0 %v102
  %v304 = vpop.f32.mrb[0].mxu0
  %v305 = vadd.f32 %v69, %v304
  %v306 = vpop.f32.mrb[0].mxu0
  %v307 = vadd.f32 %v73, %v306
  %v308 = vpop.f32.mrb[0].mxu0
  %v309 = vadd.f32 %v69, %v308
  %v310 = vpop.f32.mrb[0].mxu0
  %v311 = vadd.f32 %v73, %v310
  %312 = vmatprep.mubr.bf16.mxu0 0
  %313 = vmatmul.mubr.bf16.gmra.mrb[0].mxu0 %v103
  %v314 = vpop.f32.mrb[0].mxu0
  %v315 = vadd.f32 %v69, %v314
  %v316 = vpop.f32.mrb[0].mxu0
  %v317 = vadd.f32 %v73, %v316
  %v318 = vpop.f32.mrb[0].mxu0
  %v319 = vadd.f32 %v69, %v318
  %v320 = vpop.f32.mrb[0].mxu0
  %v321 = vadd.f32 %v73, %v320
  %322 = vmatprep.mubr.bf16.mxu0 0
  %323 = vmatmul.mubr.bf16.gmra.mrb[0].mxu0 %v104
  %v324 = vpop.f32.mrb[0].mxu0
  %v325 = vadd.f32 %v69, %v324
  %v326 = vpop.f32.mrb[0].mxu0
  %v327 = vadd.f32 %v73, %v326
  %v328 = vpop.f32.mrb[0].mxu0
  %v329 = vadd.f32 %v69, %v328
  %v330 = vpop.f32.mrb[0].mxu0
  %v331 = vadd.f32 %v73, %v330
  %332 = vmatprep.mubr.bf16.mxu0 0
  %333 = vmatmul.mubr.bf16.gmra.mrb[0].mxu0 %v105
  %v334 = vpop.f32.mrb[0].mxu0
  %v335 = vadd.f32 %v69, %v334
  %v336 = vpop.f32.mrb[0].mxu0
  %v337 = vadd.f32 %v73, %v336
  %v338 = vpop.f32.mrb[0].mxu0
  %v339 = vadd.f32 %v69, %v338
  %v340 = vpop.f32.mrb[0].mxu0
  %v341 = vadd.f32 %v73, %v340
  %342 = vdwg.mxu0
  %343 = vmatprep.subr.bf16.mxu0 %v209
  %344 = vmatpush1.bf16.msra.mxu0 %v208
  %345 = vmatprep.subr.bf16.mxu0 %v213
  %346 = vmatpush1.bf16.msra.mxu0 %v212
  %347 = vmatprep.subr.bf16.mxu0 %v217
  %348 = vmatpush1.bf16.msra.mxu0 %v216
  %349 = vmatprep.subr.bf16.mxu0 %v221
  %350 = vmatpush1.bf16.msra.mxu0 %v220
  %351 = vmatprep.subr.bf16.mxu0 %v225
  %352 = vmatpush1.bf16.msra.mxu0 %v224
  %353 = vmatprep.subr.bf16.mxu0 %v229
  %354 = vmatpush1.bf16.msra.mxu0 %v228
  %355 = vmatprep.subr.bf16.mxu0 %v233
  %356 = vmatpush1.bf16.msra.mxu0 %v232
  %357 = vmatprep.subr.bf16.mxu0 %v237
  %358 = vmatpush1.bf16.msra.mxu0 %v236
  %359 = vmatprep.subr.bf16.mxu0 0
  %360 = vmatpush1.bf16.msra.mxu0 0
  %361 = vmatprep.subr.bf16.mxu0 0
  %362 = vmatpush1.bf16.msra.mxu0 0
  %363 = vmatprep.subr.bf16.mxu0 0
  %364 = vmatpush1.bf16.msra.mxu0 0
  %365 = vmatprep.subr.bf16.mxu0 0
  %366 = vmatpush1.bf16.msra.mxu0 0
  %367 = vmatprep.subr.bf16.mxu0 0
  %368 = vmatpush1.bf16.msra.mxu0 0
  %369 = vmatprep.subr.bf16.mxu0 0
  %370 = vmatpush1.bf16.msra.mxu0 0
  %371 = vmatprep.subr.bf16.mxu0 0
  %372 = vmatpush1.bf16.msra.mxu0 0
  %373 = vmatprep.subr.bf16.mxu0 0
  %374 = vmatpush1.bf16.msra.mxu0 0
  %375 = vmatprep.mubr.bf16.mxu0 0
  %376 = vmatmul.mubr.bf16.gmra.mrb[0].mxu0 %v102
  %v377 = vpop.f32.mrb[0].mxu0
  %v378 = vadd.f32 %v77, %v377
  %v379 = vpop.f32.mrb[0].mxu0
  %v380 = vadd.f32 %v81, %v379
  %v381 = vpop.f32.mrb[0].mxu0
  %v382 = vadd.f32 %v77, %v381
  %v383 = vpop.f32.mrb[0].mxu0
  %v384 = vadd.f32 %v81, %v383
  %385 = vmatprep.mubr.bf16.mxu0 0
  %386 = vmatmul.mubr.bf16.gmra.mrb[0].mxu0 %v103
  %v387 = vpop.f32.mrb[0].mxu0
  %v388 = vadd.f32 %v77, %v387
  %v389 = vpop.f32.mrb[0].mxu0
  %v390 = vadd.f32 %v81, %v389
  %v391 = vpop.f32.mrb[0].mxu0
  %v392 = vadd.f32 %v77, %v391
  %v393 = vpop.f32.mrb[0].mxu0
  %v394 = vadd.f32 %v81, %v393
  %395 = vmatprep.mubr.bf16.mxu0 0
  %396 = vmatmul.mubr.bf16.gmra.mrb[0].mxu0 %v104
  %v397 = vpop.f32.mrb[0].mxu0
  %v398 = vadd.f32 %v77, %v397
  %v399 = vpop.f32.mrb[0].mxu0
  %v400 = vadd.f32 %v81, %v399
  %v401 = vpop.f32.mrb[0].mxu0
  %v402 = vadd.f32 %v77, %v401
  %v403 = vpop.f32.mrb[0].mxu0
  %v404 = vadd.f32 %v81, %v403
  %405 = vmatprep.mubr.bf16.mxu0 0
  %406 = vmatmul.mubr.bf16.gmra.mrb[0].mxu0 %v105
  %v407 = vpop.f32.mrb[0].mxu0
  %v408 = vadd.f32 %v77, %v407
  %v409 = vpop.f32.mrb[0].mxu0
  %v410 = vadd.f32 %v81, %v409
  %v411 = vpop.f32.mrb[0].mxu0
  %v412 = vadd.f32 %v77, %v411
  %v413 = vpop.f32.mrb[0].mxu0
  %v414 = vadd.f32 %v81, %v413
  %415 = vdwg.mxu0
  %416 = vst [vmem:[#allocation2] sm:$0xff] %v305
  %417 = vst [vmem:[#allocation2 + $0x8] sm:$0xff] %v307
  %418 = vst [vmem:[#allocation2 + $0x10] sm:$0xff] %v378
  %419 = vst [vmem:[#allocation2 + $0x18] sm:$0xff] %v380
  %420 = vst [vmem:[#allocation2 + $0x20] sm:$0xff] %v309
  %421 = vst [vmem:[#allocation2 + $0x28] sm:$0xff] %v311
  %422 = vst [vmem:[#allocation2 + $0x30] sm:$0xff] %v382
  %423 = vst [vmem:[#allocation2 + $0x38] sm:$0xff] %v384
  %424 = vst [vmem:[#allocation2 + $0x40] sm:$0xff] %v315
  %425 = vst [vmem:[#allocation2 + $0x48] sm:$0xff] %v317
  %426 = vst [vmem:[#allocation2 + $0x50] sm:$0xff] %v388
  %427 = vst [vmem:[#allocation2 + $0x58] sm:$0xff] %v390
  %428 = vst [vmem:[#allocation2 + $0x60] sm:$0xff] %v319
  %429 = vst [vmem:[#allocation2 + $0x68] sm:$0xff] %v321
  %430 = vst [vmem:[#allocation2 + $0x70] sm:$0xff] %v392
  %431 = vst [vmem:[#allocation2 + $0x78] sm:$0xff] %v394
  %432 = vst [vmem:[#allocation2 + $0x80] sm:$0xff] %v325
  %433 = vst [vmem:[#allocation2 + $0x88] sm:$0xff] %v327
  %434 = vst [vmem:[#allocation2 + $0x90] sm:$0xff] %v398
  %435 = vst [vmem:[#allocation2 + $0x98] sm:$0xff] %v400
  %436 = vst [vmem:[#allocation2 + $0xa0] sm:$0xff] %v329
  %437 = vst [vmem:[#allocation2 + $0xa8] sm:$0xff] %v331
  %438 = vst [vmem:[#allocation2 + $0xb0] sm:$0xff] %v402
  %439 = vst [vmem:[#allocation2 + $0xb8] sm:$0xff] %v404
  %440 = vst [vmem:[#allocation2 + $0xc0] sm:$0xff] %v335
  %441 = vst [vmem:[#allocation2 + $0xc8] sm:$0xff] %v337
  %442 = vst [vmem:[#allocation2 + $0xd0] sm:$0xff] %v408
  %443 = vst [vmem:[#allocation2 + $0xd8] sm:$0xff] %v410
  %444 = vst [vmem:[#allocation2 + $0xe0] sm:$0xff] %v339
  %445 = vst [vmem:[#allocation2 + $0xe8] sm:$0xff] %v341
  %446 = vst [vmem:[#allocation2 + $0xf0] sm:$0xff] %v412
  %447 = vst [vmem:[#allocation2 + $0xf8] sm:$0xff] %v414
  %s448 = smul.u32 0, 4
  %s449 = smul.addr %s448, 8
  %s450 = scalar_lea.vmem [#allocation2], %s449
  %v451 = vld [vmem:[%s450] sm:$0xff]
  %v452 = vld [vmem:[%s450 + $0x8] sm:$0xff]
  %v453 = vld [vmem:[%s450 + $0x10] sm:$0xff]
  %v454 = vld [vmem:[%s450 + $0x18] sm:$0xff]
  %v455 = vld [vmem:[%s2] sm:$0xff]
  %v456 = vld [vmem:[%s2 + $0x8] sm:$0xff]
  %v457 = vld [vmem:[%s2 + $0x10] sm:$0xff]
  %v458 = vld [vmem:[%s2 + $0x18] sm:$0xff]
  %v459 = vld [vmem:[%s2 + $0x20] sm:$0xff]
  %v460 = vld [vmem:[%s2 + $0x28] sm:$0xff]
  %v461 = vld [vmem:[%s2 + $0x30] sm:$0xff]
  %v462 = vld [vmem:[%s2 + $0x38] sm:$0xff]
  %v463 = vld [vmem:[%s2 + $0x40] sm:$0xff]
  %v464 = vld [vmem:[%s2 + $0x48] sm:$0xff]
  %v465 = vld [vmem:[%s2 + $0x50] sm:$0xff]
  %v466 = vld [vmem:[%s2 + $0x58] sm:$0xff]
  %v467 = vld [vmem:[%s2 + $0x60] sm:$0xff]
  %v468 = vld [vmem:[%s2 + $0x68] sm:$0xff]
  %v469 = vld [vmem:[%s2 + $0x70] sm:$0xff]
  %v470 = vld [vmem:[%s2 + $0x78] sm:$0xff]
  %v471 = vld [vmem:[%s2 + $0x80] sm:$0xff]
  %v472 = vld [vmem:[%s2 + $0x88] sm:$0xff]
  %v473 = vld [vmem:[%s2 + $0x90] sm:$0xff]
  %v474 = vld [vmem:[%s2 + $0x98] sm:$0xff]
  %v475 = vld [vmem:[%s2 + $0xa0] sm:$0xff]
  %v476 = vld [vmem:[%s2 + $0xa8] sm:$0xff]
  %v477 = vld [vmem:[%s2 + $0xb0] sm:$0xff]
  %v478 = vld [vmem:[%s2 + $0xb8] sm:$0xff]
  %v479 = vld [vmem:[%s2 + $0xc0] sm:$0xff]
  %v480 = vld [vmem:[%s2 + $0xc8] sm:$0xff]
  %v481 = vld [vmem:[%s2 + $0xd0] sm:$0xff]
  %v482 = vld [vmem:[%s2 + $0xd8] sm:$0xff]
  %v483 = vld [vmem:[%s2 + $0xe0] sm:$0xff]
  %v484 = vld [vmem:[%s2 + $0xe8] sm:$0xff]
  %v485 = vld [vmem:[%s2 + $0xf0] sm:$0xff]
  %v486 = vld [vmem:[%s2 + $0xf8] sm:$0xff]
  %v519 = vunpack.c.l.b16 %v455
  %v520 = vunpack.c.h.b16 %v455
  %v521 = vunpack.c.l.b16 %v456
  %v522 = vunpack.c.h.b16 %v456
  %v523 = vunpack.c.l.b16 %v457
  %v524 = vunpack.c.h.b16 %v457
  %v525 = vunpack.c.l.b16 %v458
  %v526 = vunpack.c.h.b16 %v458
  %v527 = vunpack.c.l.b16 %v459
  %v528 = vunpack.c.h.b16 %v459
  %v529 = vunpack.c.l.b16 %v460
  %v530 = vunpack.c.h.b16 %v460
  %v531 = vunpack.c.l.b16 %v461
  %v532 = vunpack.c.h.b16 %v461
  %v533 = vunpack.c.l.b16 %v462
  %v534 = vunpack.c.h.b16 %v462
  %v535 = vunpack.c.l.b16 %v463
  %v536 = vunpack.c.h.b16 %v463
  %v537 = vunpack.c.l.b16 %v464
  %v538 = vunpack.c.h.b16 %v464
  %v539 = vunpack.c.l.b16 %v465
  %v540 = vunpack.c.h.b16 %v465
  %v541 = vunpack.c.l.b16 %v466
  %v542 = vunpack.c.h.b16 %v466
  %v543 = vunpack.c.l.b16 %v467
  %v544 = vunpack.c.h.b16 %v467
  %v545 = vunpack.c.l.b16 %v468
  %v546 = vunpack.c.h.b16 %v468
  %v547 = vunpack.c.l.b16 %v469
  %v548 = vunpack.c.h.b16 %v469
  %v549 = vunpack.c.l.b16 %v470
  %v550 = vunpack.c.h.b16 %v470
  %v551 = vunpack.c.l.b16 %v471
  %v552 = vunpack.c.h.b16 %v471
  %v553 = vunpack.c.l.b16 %v472
  %v554 = vunpack.c.h.b16 %v472
  %v555 = vunpack.c.l.b16 %v473
  %v556 = vunpack.c.h.b16 %v473
  %v557 = vunpack.c.l.b16 %v474
  %v558 = vunpack.c.h.b16 %v474
  %v559 = vunpack.c.l.b16 %v475
  %v560 = vunpack.c.h.b16 %v475
  %v561 = vunpack.c.l.b16 %v476
  %v562 = vunpack.c.h.b16 %v476
  %v563 = vunpack.c.l.b16 %v477
  %v564 = vunpack.c.h.b16 %v477
  %v565 = vunpack.c.l.b16 %v478
  %v566 = vunpack.c.h.b16 %v478
  %v567 = vunpack.c.l.b16 %v479
  %v568 = vunpack.c.h.b16 %v479
  %v569 = vunpack.c.l.b16 %v480
  %v570 = vunpack.c.h.b16 %v480
  %v571 = vunpack.c.l.b16 %v481
  %v572 = vunpack.c.h.b16 %v481
  %v573 = vunpack.c.l.b16 %v482
  %v574 = vunpack.c.h.b16 %v482
  %v575 = vunpack.c.l.b16 %v483
  %v576 = vunpack.c.h.b16 %v483
  %v577 = vunpack.c.l.b16 %v484
  %v578 = vunpack.c.h.b16 %v484
  %v579 = vunpack.c.l.b16 %v485
  %v580 = vunpack.c.h.b16 %v485
  %v581 = vunpack.c.l.b16 %v486
  %v582 = vunpack.c.h.b16 %v486
  %v583 = vpack.c.b16 %v523, %v519
  %v584 = vpack.c.b16 %v524, %v520
  %v585 = vpack.c.b16 %v525, %v521
  %v586 = vpack.c.b16 %v526, %v522
  %v587 = vpack.c.b16 %v531, %v527
  %v588 = vpack.c.b16 %v532, %v528
  %v589 = vpack.c.b16 %v533, %v529
  %v590 = vpack.c.b16 %v534, %v530
  %v591 = vpack.c.b16 %v539, %v535
  %v592 = vpack.c.b16 %v540, %v536
  %v593 = vpack.c.b16 %v541, %v537
  %v594 = vpack.c.b16 %v542, %v538
  %v595 = vpack.c.b16 %v547, %v543
  %v596 = vpack.c.b16 %v548, %v544
  %v597 = vpack.c.b16 %v549, %v545
  %v598 = vpack.c.b16 %v550, %v546
  %v599 = vpack.c.b16 %v555, %v551
  %v600 = vpack.c.b16 %v556, %v552
  %v601 = vpack.c.b16 %v557, %v553
  %v602 = vpack.c.b16 %v558, %v554
  %v603 = vpack.c.b16 %v563, %v559
  %v604 = vpack.c.b16 %v564, %v560
  %v605 = vpack.c.b16 %v565, %v561
  %v606 = vpack.c.b16 %v566, %v562
  %v607 = vpack.c.b16 %v571, %v567
  %v608 = vpack.c.b16 %v572, %v568
  %v609 = vpack.c.b16 %v573, %v569
  %v610 = vpack.c.b16 %v574, %v570
  %v611 = vpack.c.b16 %v579, %v575
  %v612 = vpack.c.b16 %v580, %v576
  %v613 = vpack.c.b16 %v581, %v577
  %v614 = vpack.c.b16 %v582, %v578
  %647 = vmatprep.subr.bf16.mxu0 %v584
  %648 = vmatpush1.bf16.msra.mxu0 %v583
  %649 = vmatprep.subr.bf16.mxu0 %v588
  %650 = vmatpush1.bf16.msra.mxu0 %v587
  %651 = vmatprep.subr.bf16.mxu0 %v592
  %652 = vmatpush1.bf16.msra.mxu0 %v591
  %653 = vmatprep.subr.bf16.mxu0 %v596
  %654 = vmatpush1.bf16.msra.mxu0 %v595
  %655 = vmatprep.subr.bf16.mxu0 %v600
  %656 = vmatpush1.bf16.msra.mxu0 %v599
  %657 = vmatprep.subr.bf16.mxu0 %v604
  %658 = vmatpush1.bf16.msra.mxu0 %v603
  %659 = vmatprep.subr.bf16.mxu0 %v608
  %660 = vmatpush1.bf16.msra.mxu0 %v607
  %661 = vmatprep.subr.bf16.mxu0 %v612
  %662 = vmatpush1.bf16.msra.mxu0 %v611
  %663 = vmatprep.subr.bf16.mxu0 0
  %664 = vmatpush1.bf16.msra.mxu0 0
  %665 = vmatprep.subr.bf16.mxu0 0
  %666 = vmatpush1.bf16.msra.mxu0 0
  %667 = vmatprep.subr.bf16.mxu0 0
  %668 = vmatpush1.bf16.msra.mxu0 0
  %669 = vmatprep.subr.bf16.mxu0 0
  %670 = vmatpush1.bf16.msra.mxu0 0
  %671 = vmatprep.subr.bf16.mxu0 0
  %672 = vmatpush1.bf16.msra.mxu0 0
  %673 = vmatprep.subr.bf16.mxu0 0
  %674 = vmatpush1.bf16.msra.mxu0 0
  %675 = vmatprep.subr.bf16.mxu0 0
  %676 = vmatpush1.bf16.msra.mxu0 0
  %677 = vmatprep.subr.bf16.mxu0 0
  %678 = vmatpush1.bf16.msra.mxu0 0
  %679 = vmatprep.mubr.bf16.mxu0 0
  %680 = vmatmul.mubr.bf16.gmra.mrb[0].mxu0 0
  %v681 = vpop.f32.mrb[0].mxu0
  %v682 = vadd.f32 0.0, %v681
  %v683 = vpop.f32.mrb[0].mxu0
  %v684 = vadd.f32 0.0, %v683
  %v685 = vpop.f32.mrb[0].mxu0
  %v686 = vpop.f32.mrb[0].mxu0
  %687 = vdwg.mxu0
  %688 = vmatprep.subr.bf16.mxu0 %v586
  %689 = vmatpush1.bf16.msra.mxu0 %v585
  %690 = vmatprep.subr.bf16.mxu0 %v590
  %691 = vmatpush1.bf16.msra.mxu0 %v589
  %692 = vmatprep.subr.bf16.mxu0 %v594
  %693 = vmatpush1.bf16.msra.mxu0 %v593
  %694 = vmatprep.subr.bf16.mxu0 %v598
  %695 = vmatpush1.bf16.msra.mxu0 %v597
  %696 = vmatprep.subr.bf16.mxu0 %v602
  %697 = vmatpush1.bf16.msra.mxu0 %v601
  %698 = vmatprep.subr.bf16.mxu0 %v606
  %699 = vmatpush1.bf16.msra.mxu0 %v605
  %700 = vmatprep.subr.bf16.mxu0 %v610
  %701 = vmatpush1.bf16.msra.mxu0 %v609
  %702 = vmatprep.subr.bf16.mxu0 %v614
  %703 = vmatpush1.bf16.msra.mxu0 %v613
  %704 = vmatprep.subr.bf16.mxu0 0
  %705 = vmatpush1.bf16.msra.mxu0 0
  %706 = vmatprep.subr.bf16.mxu0 0
  %707 = vmatpush1.bf16.msra.mxu0 0
  %708 = vmatprep.subr.bf16.mxu0 0
  %709 = vmatpush1.bf16.msra.mxu0 0
  %710 = vmatprep.subr.bf16.mxu0 0
  %711 = vmatpush1.bf16.msra.mxu0 0
  %712 = vmatprep.subr.bf16.mxu0 0
  %713 = vmatpush1.bf16.msra.mxu0 0
  %714 = vmatprep.subr.bf16.mxu0 0
  %715 = vmatpush1.bf16.msra.mxu0 0
  %716 = vmatprep.subr.bf16.mxu0 0
  %717 = vmatpush1.bf16.msra.mxu0 0
  %718 = vmatprep.subr.bf16.mxu0 0
  %719 = vmatpush1.bf16.msra.mxu0 0
  %720 = vmatprep.mubr.bf16.mxu0 0
  %721 = vmatmul.mubr.bf16.gmra.mrb[0].mxu0 0
  %v722 = vpop.f32.mrb[0].mxu0
  %v723 = vadd.f32 0.0, %v722
  %v724 = vpop.f32.mrb[0].mxu0
  %v725 = vadd.f32 0.0, %v724
  %v726 = vpop.f32.mrb[0].mxu0
  %v727 = vpop.f32.mrb[0].mxu0
  %728 = vdwg.mxu0
  %v729 = vadd.f32 %v451, %v682
  %v730 = vadd.f32 %v452, %v684
  %v731 = vadd.f32 %v453, %v723
  %v732 = vadd.f32 %v454, %v725
  %v733 = vxor.u32 %v729, 2147483648
  %v734 = vxor.u32 %v730, 2147483648
  %v735 = vxor.u32 %v731, 2147483648
  %v736 = vmul.f32 %v733, 1.442695
  %v737 = vpow.pop %v736
  %v738 = vmul.f32 %v734, 1.442695
  %v739 = vpow.pop %v738
  %v740 = vmul.f32 %v735, 1.442695
  %v741 = vpow.pop %v740
  %v742 = vadd.f32 %v737, 1.0
  %v743 = vadd.f32 %v739, 1.0
  %v744 = vadd.f32 %v741, 1.0
  %v745 = vrcp.pop %v742
  %v746 = vmul.f32 1.0, %v745
  %v747 = vrcp.pop %v743
  %v748 = vmul.f32 1.0, %v747
  %v749 = vrcp.pop %v744
  %v750 = vmul.f32 1.0, %v749
  %v751 = vtanh.pop %v732
  %v752 = vmul.f32 %v748, 0.0
  %v753 = vmul.f32 %v746, %v751
  %v754 = vadd.f32 %v752, %v753
  %v755 = vtanh.pop %v754
  %v756 = vmul.f32 %v750, %v755
  %s757 = smul.u32 1, 4
  %s758 = smul.addr %s757, 8
  %s759 = scalar_lea.vmem [#allocation2], %s758
  %v760 = vld [vmem:[%s759] sm:$0xff]
  %v761 = vld [vmem:[%s759 + $0x8] sm:$0xff]
  %v762 = vld [vmem:[%s759 + $0x10] sm:$0xff]
  %v763 = vld [vmem:[%s759 + $0x18] sm:$0xff]
  %v764 = vpack.c.bf16 %v756, %v756
  %765 = vmatprep.subr.bf16.mxu0 %v584
  %766 = vmatpush1.bf16.msra.mxu0 %v583
  %767 = vmatprep.subr.bf16.mxu0 %v588
  %768 = vmatpush1.bf16.msra.mxu0 %v587
  %769 = vmatprep.subr.bf16.mxu0 %v592
  %770 = vmatpush1.bf16.msra.mxu0 %v591
  %771 = vmatprep.subr.bf16.mxu0 %v596
  %772 = vmatpush1.bf16.msra.mxu0 %v595
  %773 = vmatprep.subr.bf16.mxu0 %v600
  %774 = vmatpush1.bf16.msra.mxu0 %v599
  %775 = vmatprep.subr.bf16.mxu0 %v604
  %776 = vmatpush1.bf16.msra.mxu0 %v603
  %777 = vmatprep.subr.bf16.mxu0 %v608
  %778 = vmatpush1.bf16.msra.mxu0 %v607
  %779 = vmatprep.subr.bf16.mxu0 %v612
  %780 = vmatpush1.bf16.msra.mxu0 %v611
  %781 = vmatprep.subr.bf16.mxu0 0
  %782 = vmatpush1.bf16.msra.mxu0 0
  %783 = vmatprep.subr.bf16.mxu0 0
  %784 = vmatpush1.bf16.msra.mxu0 0
  %785 = vmatprep.subr.bf16.mxu0 0
  %786 = vmatpush1.bf16.msra.mxu0 0
  %787 = vmatprep.subr.bf16.mxu0 0
  %788 = vmatpush1.bf16.msra.mxu0 0
  %789 = vmatprep.subr.bf16.mxu0 0
  %790 = vmatpush1.bf16.msra.mxu0 0
  %791 = vmatprep.subr.bf16.mxu0 0
  %792 = vmatpush1.bf16.msra.mxu0 0
  %793 = vmatprep.subr.bf16.mxu0 0
  %794 = vmatpush1.bf16.msra.mxu0 0
  %795 = vmatprep.subr.bf16.mxu0 0
  %796 = vmatpush1.bf16.msra.mxu0 0
  %797 = vmatprep.mubr.bf16.mxu0 0
  %798 = vmatmul.mubr.bf16.gmra.mrb[0].mxu0 %v764
  %v799 = vpop.f32.mrb[0].mxu0
  %v800 = vadd.f32 0.0, %v799
  %v801 = vpop.f32.mrb[0].mxu0
  %v802 = vadd.f32 0.0, %v801
  %v803 = vpop.f32.mrb[0].mxu0
  %v804 = vpop.f32.mrb[0].mxu0
  %805 = vdwg.mxu0
  %806 = vmatprep.subr.bf16.mxu0 %v586
  %807 = vmatpush1.bf16.msra.mxu0 %v585
  %808 = vmatprep.subr.bf16.mxu0 %v590
  %809 = vmatpush1.bf16.msra.mxu0 %v589
  %810 = vmatprep.subr.bf16.mxu0 %v594
  %811 = vmatpush1.bf16.msra.mxu0 %v593
  %812 = vmatprep.subr.bf16.mxu0 %v598
  %813 = vmatpush1.bf16.msra.mxu0 %v597
  %814 = vmatprep.subr.bf16.mxu0 %v602
  %815 = vmatpush1.bf16.msra.mxu0 %v601
  %816 = vmatprep.subr.bf16.mxu0 %v606
  %817 = vmatpush1.bf16.msra.mxu0 %v605
  %818 = vmatprep.subr.bf16.mxu0 %v610
  %819 = vmatpush1.bf16.msra.mxu0 %v609
  %820 = vmatprep.subr.bf16.mxu0 %v614
  %821 = vmatpush1.bf16.msra.mxu0 %v613
  %822 = vmatprep.subr.bf16.mxu0 0
  %823 = vmatpush1.bf16.msra.mxu0 0
  %824 = vmatprep.subr.bf16.mxu0 0
  %825 = vmatpush1.bf16.msra.mxu0 0
  %826 = vmatprep.subr.bf16.mxu0 0
  %827 = vmatpush1.bf16.msra.mxu0 0
  %828 = vmatprep.subr.bf16.mxu0 0
  %829 = vmatpush1.bf16.msra.mxu0 0
  %830 = vmatprep.subr.bf16.mxu0 0
  %831 = vmatpush1.bf16.msra.mxu0 0
  %832 = vmatprep.subr.bf16.mxu0 0
  %833 = vmatpush1.bf16.msra.mxu0 0
  %834 = vmatprep.subr.bf16.mxu0 0
  %835 = vmatpush1.bf16.msra.mxu0 0
  %836 = vmatprep.subr.bf16.mxu0 0
  %837 = vmatpush1.bf16.msra.mxu0 0
  %838 = vmatprep.mubr.bf16.mxu0 0
  %839 = vmatmul.mubr.bf16.gmra.mrb[0].mxu0 %v764
  %v840 = vpop.f32.mrb[0].mxu0
  %v841 = vadd.f32 0.0, %v840
  %v842 = vpop.f32.mrb[0].mxu0
  %v843 = vadd.f32 0.0, %v842
  %v844 = vpop.f32.mrb[0].mxu0
  %v845 = vpop.f32.mrb[0].mxu0
  %846 = vdwg.mxu0
  %v847 = vadd.f32 %v760, %v800
  %v848 = vadd.f32 %v761, %v802
  %v849 = vadd.f32 %v762, %v841
  %v850 = vadd.f32 %v763, %v843
  %v851 = vxor.u32 %v847, 2147483648
  %v852 = vxor.u32 %v848, 2147483648
  %v853 = vxor.u32 %v849, 2147483648
  %v854 = vmul.f32 %v851, 1.442695
  %v855 = vpow.pop %v854
  %v856 = vmul.f32 %v852, 1.442695
  %v857 = vpow.pop %v856
  %v858 = vmul.f32 %v853, 1.442695
  %v859 = vpow.pop %v858
  %v860 = vadd.f32 %v855, 1.0
  %v861 = vadd.f32 %v857, 1.0
  %v862 = vadd.f32 %v859, 1.0
  %v863 = vrcp.pop %v860
  %v864 = vmul.f32 1.0, %v863
  %v865 = vrcp.pop %v861
  %v866 = vmul.f32 1.0, %v865
  %v867 = vrcp.pop %v862
  %v868 = vmul.f32 1.0, %v867
  %v869 = vtanh.pop %v850
  %v870 = vmul.f32 %v866, %v754
  %v871 = vmul.f32 %v864, %v869
  %v872 = vadd.f32 %v870, %v871
  %v873 = vtanh.pop %v872
  %v874 = vmul.f32 %v868, %v873
  %s875 = smul.u32 2, 4
  %s876 = smul.addr %s875, 8
  %s877 = scalar_lea.vmem [#allocation2], %s876
  %v878 = vld [vmem:[%s877] sm:$0xff]
  %v879 = vld [vmem:[%s877 + $0x8] sm:$0xff]
  %v880 = vld [vmem:[%s877 + $0x10] sm:$0xff]
  %v881 = vld [vmem:[%s877 + $0x18] sm:$0xff]
  %v882 = vpack.c.bf16 %v874, %v874
  %883 = vmatprep.subr.bf16.mxu0 %v584
  %884 = vmatpush1.bf16.msra.mxu0 %v583
  %885 = vmatprep.subr.bf16.mxu0 %v588
  %886 = vmatpush1.bf16.msra.mxu0 %v587
  %887 = vmatprep.subr.bf16.mxu0 %v592
  %888 = vmatpush1.bf16.msra.mxu0 %v591
  %889 = vmatprep.subr.bf16.mxu0 %v596
  %890 = vmatpush1.bf16.msra.mxu0 %v595
  %891 = vmatprep.subr.bf16.mxu0 %v600
  %892 = vmatpush1.bf16.msra.mxu0 %v599
  %893 = vmatprep.subr.bf16.mxu0 %v604
  %894 = vmatpush1.bf16.msra.mxu0 %v603
  %895 = vmatprep.subr.bf16.mxu0 %v608
  %896 = vmatpush1.bf16.msra.mxu0 %v607
  %897 = vmatprep.subr.bf16.mxu0 %v612
  %898 = vmatpush1.bf16.msra.mxu0 %v611
  %899 = vmatprep.subr.bf16.mxu0 0
  %900 = vmatpush1.bf16.msra.mxu0 0
  %901 = vmatprep.subr.bf16.mxu0 0
  %902 = vmatpush1.bf16.msra.mxu0 0
  %903 = vmatprep.subr.bf16.mxu0 0
  %904 = vmatpush1.bf16.msra.mxu0 0
  %905 = vmatprep.subr.bf16.mxu0 0
  %906 = vmatpush1.bf16.msra.mxu0 0
  %907 = vmatprep.subr.bf16.mxu0 0
  %908 = vmatpush1.bf16.msra.mxu0 0
  %909 = vmatprep.subr.bf16.mxu0 0
  %910 = vmatpush1.bf16.msra.mxu0 0
  %911 = vmatprep.subr.bf16.mxu0 0
  %912 = vmatpush1.bf16.msra.mxu0 0
  %913 = vmatprep.subr.bf16.mxu0 0
  %914 = vmatpush1.bf16.msra.mxu0 0
  %915 = vmatprep.mubr.bf16.mxu0 0
  %916 = vmatmul.mubr.bf16.gmra.mrb[0].mxu0 %v882
  %v917 = vpop.f32.mrb[0].mxu0
  %v918 = vadd.f32 0.0, %v917
  %v919 = vpop.f32.mrb[0].mxu0
  %v920 = vadd.f32 0.0, %v919
  %v921 = vpop.f32.mrb[0].mxu0
  %v922 = vpop.f32.mrb[0].mxu0
  %923 = vdwg.mxu0
  %924 = vmatprep.subr.bf16.mxu0 %v586
  %925 = vmatpush1.bf16.msra.mxu0 %v585
  %926 = vmatprep.subr.bf16.mxu0 %v590
  %927 = vmatpush1.bf16.msra.mxu0 %v589
  %928 = vmatprep.subr.bf16.mxu0 %v594
  %929 = vmatpush1.bf16.msra.mxu0 %v593
  %930 = vmatprep.subr.bf16.mxu0 %v598
  %931 = vmatpush1.bf16.msra.mxu0 %v597
  %932 = vmatprep.subr.bf16.mxu0 %v602
  %933 = vmatpush1.bf16.msra.mxu0 %v601
  %934 = vmatprep.subr.bf16.mxu0 %v606
  %935 = vmatpush1.bf16.msra.mxu0 %v605
  %936 = vmatprep.subr.bf16.mxu0 %v610
  %937 = vmatpush1.bf16.msra.mxu0 %v609
  %938 = vmatprep.subr.bf16.mxu0 %v614
  %939 = vmatpush1.bf16.msra.mxu0 %v613
  %940 = vmatprep.subr.bf16.mxu0 0
  %941 = vmatpush1.bf16.msra.mxu0 0
  %942 = vmatprep.subr.bf16.mxu0 0
  %943 = vmatpush1.bf16.msra.mxu0 0
  %944 = vmatprep.subr.bf16.mxu0 0
  %945 = vmatpush1.bf16.msra.mxu0 0
  %946 = vmatprep.subr.bf16.mxu0 0
  %947 = vmatpush1.bf16.msra.mxu0 0
  %948 = vmatprep.subr.bf16.mxu0 0
  %949 = vmatpush1.bf16.msra.mxu0 0
  %950 = vmatprep.subr.bf16.mxu0 0
  %951 = vmatpush1.bf16.msra.mxu0 0
  %952 = vmatprep.subr.bf16.mxu0 0
  %953 = vmatpush1.bf16.msra.mxu0 0
  %954 = vmatprep.subr.bf16.mxu0 0
  %955 = vmatpush1.bf16.msra.mxu0 0
  %956 = vmatprep.mubr.bf16.mxu0 0
  %957 = vmatmul.mubr.bf16.gmra.mrb[0].mxu0 %v882
  %v958 = vpop.f32.mrb[0].mxu0
  %v959 = vadd.f32 0.0, %v958
  %v960 = vpop.f32.mrb[0].mxu0
  %v961 = vadd.f32 0.0, %v960
  %v962 = vpop.f32.mrb[0].mxu0
  %v963 = vpop.f32.mrb[0].mxu0
  %964 = vdwg.mxu0
  %v965 = vadd.f32 %v878, %v918
  %v966 = vadd.f32 %v879, %v920
  %v967 = vadd.f32 %v880, %v959
  %v968 = vadd.f32 %v881, %v961
  %v969 = vxor.u32 %v965, 2147483648
  %v970 = vxor.u32 %v966, 2147483648
  %v971 = vxor.u32 %v967, 2147483648
  %v972 = vmul.f32 %v969, 1.442695
  %v973 = vpow.pop %v972
  %v974 = vmul.f32 %v970, 1.442695
  %v975 = vpow.pop %v974
  %v976 = vmul.f32 %v971, 1.442695
  %v977 = vpow.pop %v976
  %v978 = vadd.f32 %v973, 1.0
  %v979 = vadd.f32 %v975, 1.0
  %v980 = vadd.f32 %v977, 1.0
  %v981 = vrcp.pop %v978
  %v982 = vmul.f32 1.0, %v981
  %v983 = vrcp.pop %v979
  %v984 = vmul.f32 1.0, %v983
  %v985 = vrcp.pop %v980
  %v986 = vmul.f32 1.0, %v985
  %v987 = vtanh.pop %v968
  %v988 = vmul.f32 %v984, %v872
  %v989 = vmul.f32 %v982, %v987
  %v990 = vadd.f32 %v988, %v989
  %v991 = vtanh.pop %v990
  %v992 = vmul.f32 %v986, %v991
  %s993 = smul.u32 3, 4
  %s994 = smul.addr %s993, 8
  %s995 = scalar_lea.vmem [#allocation2], %s994
  %v996 = vld [vmem:[%s995] sm:$0xff]
  %v997 = vld [vmem:[%s995 + $0x8] sm:$0xff]
  %v998 = vld [vmem:[%s995 + $0x10] sm:$0xff]
  %v999 = vld [vmem:[%s995 + $0x18] sm:$0xff]
  %v1000 = vpack.c.bf16 %v992, %v992
  %1001 = vmatprep.subr.bf16.mxu0 %v584
  %1002 = vmatpush1.bf16.msra.mxu0 %v583
  %1003 = vmatprep.subr.bf16.mxu0 %v588
  %1004 = vmatpush1.bf16.msra.mxu0 %v587
  %1005 = vmatprep.subr.bf16.mxu0 %v592
  %1006 = vmatpush1.bf16.msra.mxu0 %v591
  %1007 = vmatprep.subr.bf16.mxu0 %v596
  %1008 = vmatpush1.bf16.msra.mxu0 %v595
  %1009 = vmatprep.subr.bf16.mxu0 %v600
  %1010 = vmatpush1.bf16.msra.mxu0 %v599
  %1011 = vmatprep.subr.bf16.mxu0 %v604
  %1012 = vmatpush1.bf16.msra.mxu0 %v603
  %1013 = vmatprep.subr.bf16.mxu0 %v608
  %1014 = vmatpush1.bf16.msra.mxu0 %v607
  %1015 = vmatprep.subr.bf16.mxu0 %v612
  %1016 = vmatpush1.bf16.msra.mxu0 %v611
  %1017 = vmatprep.subr.bf16.mxu0 0
  %1018 = vmatpush1.bf16.msra.mxu0 0
  %1019 = vmatprep.subr.bf16.mxu0 0
  %1020 = vmatpush1.bf16.msra.mxu0 0
  %1021 = vmatprep.subr.bf16.mxu0 0
  %1022 = vmatpush1.bf16.msra.mxu0 0
  %1023 = vmatprep.subr.bf16.mxu0 0
  %1024 = vmatpush1.bf16.msra.mxu0 0
  %1025 = vmatprep.subr.bf16.mxu0 0
  %1026 = vmatpush1.bf16.msra.mxu0 0
  %1027 = vmatprep.subr.bf16.mxu0 0
  %1028 = vmatpush1.bf16.msra.mxu0 0
  %1029 = vmatprep.subr.bf16.mxu0 0
  %1030 = vmatpush1.bf16.msra.mxu0 0
  %1031 = vmatprep.subr.bf16.mxu0 0
  %1032 = vmatpush1.bf16.msra.mxu0 0
  %1033 = vmatprep.mubr.bf16.mxu0 0
  %1034 = vmatmul.mubr.bf16.gmra.mrb[0].mxu0 %v1000
  %v1035 = vpop.f32.mrb[0].mxu0
  %v1036 = vadd.f32 0.0, %v1035
  %v1037 = vpop.f32.mrb[0].mxu0
  %v1038 = vadd.f32 0.0, %v1037
  %v1039 = vpop.f32.mrb[0].mxu0
  %v1040 = vpop.f32.mrb[0].mxu0
  %1041 = vdwg.mxu0
  %1042 = vmatprep.subr.bf16.mxu0 %v586
  %1043 = vmatpush1.bf16.msra.mxu0 %v585
  %1044 = vmatprep.subr.bf16.mxu0 %v590
  %1045 = vmatpush1.bf16.msra.mxu0 %v589
  %1046 = vmatprep.subr.bf16.mxu0 %v594
  %1047 = vmatpush1.bf16.msra.mxu0 %v593
  %1048 = vmatprep.subr.bf16.mxu0 %v598
  %1049 = vmatpush1.bf16.msra.mxu0 %v597
  %1050 = vmatprep.subr.bf16.mxu0 %v602
  %1051 = vmatpush1.bf16.msra.mxu0 %v601
  %1052 = vmatprep.subr.bf16.mxu0 %v606
  %1053 = vmatpush1.bf16.msra.mxu0 %v605
  %1054 = vmatprep.subr.bf16.mxu0 %v610
  %1055 = vmatpush1.bf16.msra.mxu0 %v609
  %1056 = vmatprep.subr.bf16.mxu0 %v614
  %1057 = vmatpush1.bf16.msra.mxu0 %v613
  %1058 = vmatprep.subr.bf16.mxu0 0
  %1059 = vmatpush1.bf16.msra.mxu0 0
  %1060 = vmatprep.subr.bf16.mxu0 0
  %1061 = vmatpush1.bf16.msra.mxu0 0
  %1062 = vmatprep.subr.bf16.mxu0 0
  %1063 = vmatpush1.bf16.msra.mxu0 0
  %1064 = vmatprep.subr.bf16.mxu0 0
  %1065 = vmatpush1.bf16.msra.mxu0 0
  %1066 = vmatprep.subr.bf16.mxu0 0
  %1067 = vmatpush1.bf16.msra.mxu0 0
  %1068 = vmatprep.subr.bf16.mxu0 0
  %1069 = vmatpush1.bf16.msra.mxu0 0
  %1070 = vmatprep.subr.bf16.mxu0 0
  %1071 = vmatpush1.bf16.msra.mxu0 0
  %1072 = vmatprep.subr.bf16.mxu0 0
  %1073 = vmatpush1.bf16.msra.mxu0 0
  %1074 = vmatprep.mubr.bf16.mxu0 0
  %1075 = vmatmul.mubr.bf16.gmra.mrb[0].mxu0 %v1000
  %v1076 = vpop.f32.mrb[0].mxu0
  %v1077 = vadd.f32 0.0, %v1076
  %v1078 = vpop.f32.mrb[0].mxu0
  %v1079 = vadd.f32 0.0, %v1078
  %v1080 = vpop.f32.mrb[0].mxu0
  %v1081 = vpop.f32.mrb[0].mxu0
  %1082 = vdwg.mxu0
  %v1083 = vadd.f32 %v996, %v1036
  %v1084 = vadd.f32 %v997, %v1038
  %v1085 = vadd.f32 %v998, %v1077
  %v1086 = vadd.f32 %v999, %v1079
  %v1087 = vxor.u32 %v1083, 2147483648
  %v1088 = vxor.u32 %v1084, 2147483648
  %v1089 = vxor.u32 %v1085, 2147483648
  %v1090 = vmul.f32 %v1087, 1.442695
  %v1091 = vpow.pop %v1090
  %v1092 = vmul.f32 %v1088, 1.442695
  %v1093 = vpow.pop %v1092
  %v1094 = vmul.f32 %v1089, 1.442695
  %v1095 = vpow.pop %v1094
  %v1096 = vadd.f32 %v1091, 1.0
  %v1097 = vadd.f32 %v1093, 1.0
  %v1098 = vadd.f32 %v1095, 1.0
  %v1099 = vrcp.pop %v1096
  %v1100 = vmul.f32 1.0, %v1099
  %v1101 = vrcp.pop %v1097
  %v1102 = vmul.f32 1.0, %v1101
  %v1103 = vrcp.pop %v1098
  %v1104 = vmul.f32 1.0, %v1103
  %v1105 = vtanh.pop %v1086
  %v1106 = vmul.f32 %v1102, %v990
  %v1107 = vmul.f32 %v1100, %v1105
  %v1108 = vadd.f32 %v1106, %v1107
  %v1109 = vtanh.pop %v1108
  %v1110 = vmul.f32 %v1104, %v1109
  %s1111 = smul.u32 4, 4
  %s1112 = smul.addr %s1111, 8
  %s1113 = scalar_lea.vmem [#allocation2], %s1112
  %v1114 = vld [vmem:[%s1113] sm:$0xff]
  %v1115 = vld [vmem:[%s1113 + $0x8] sm:$0xff]
  %v1116 = vld [vmem:[%s1113 + $0x10] sm:$0xff]
  %v1117 = vld [vmem:[%s1113 + $0x18] sm:$0xff]
  %v1118 = vpack.c.bf16 %v1110, %v1110
  %1119 = vmatprep.subr.bf16.mxu0 %v584
  %1120 = vmatpush1.bf16.msra.mxu0 %v583
  %1121 = vmatprep.subr.bf16.mxu0 %v588
  %1122 = vmatpush1.bf16.msra.mxu0 %v587
  %1123 = vmatprep.subr.bf16.mxu0 %v592
  %1124 = vmatpush1.bf16.msra.mxu0 %v591
  %1125 = vmatprep.subr.bf16.mxu0 %v596
  %1126 = vmatpush1.bf16.msra.mxu0 %v595
  %1127 = vmatprep.subr.bf16.mxu0 %v600
  %1128 = vmatpush1.bf16.msra.mxu0 %v599
  %1129 = vmatprep.subr.bf16.mxu0 %v604
  %1130 = vmatpush1.bf16.msra.mxu0 %v603
  %1131 = vmatprep.subr.bf16.mxu0 %v608
  %1132 = vmatpush1.bf16.msra.mxu0 %v607
  %1133 = vmatprep.subr.bf16.mxu0 %v612
  %1134 = vmatpush1.bf16.msra.mxu0 %v611
  %1135 = vmatprep.subr.bf16.mxu0 0
  %1136 = vmatpush1.bf16.msra.mxu0 0
  %1137 = vmatprep.subr.bf16.mxu0 0
  %1138 = vmatpush1.bf16.msra.mxu0 0
  %1139 = vmatprep.subr.bf16.mxu0 0
  %1140 = vmatpush1.bf16.msra.mxu0 0
  %1141 = vmatprep.subr.bf16.mxu0 0
  %1142 = vmatpush1.bf16.msra.mxu0 0
  %1143 = vmatprep.subr.bf16.mxu0 0
  %1144 = vmatpush1.bf16.msra.mxu0 0
  %1145 = vmatprep.subr.bf16.mxu0 0
  %1146 = vmatpush1.bf16.msra.mxu0 0
  %1147 = vmatprep.subr.bf16.mxu0 0
  %1148 = vmatpush1.bf16.msra.mxu0 0
  %1149 = vmatprep.subr.bf16.mxu0 0
  %1150 = vmatpush1.bf16.msra.mxu0 0
  %1151 = vmatprep.mubr.bf16.mxu0 0
  %1152 = vmatmul.mubr.bf16.gmra.mrb[0].mxu0 %v1118
  %v1153 = vpop.f32.mrb[0].mxu0
  %v1154 = vadd.f32 0.0, %v1153
  %v1155 = vpop.f32.mrb[0].mxu0
  %v1156 = vadd.f32 0.0, %v1155
  %v1157 = vpop.f32.mrb[0].mxu0
  %v1158 = vpop.f32.mrb[0].mxu0
  %1159 = vdwg.mxu0
  %1160 = vmatprep.subr.bf16.mxu0 %v586
  %1161 = vmatpush1.bf16.msra.mxu0 %v585
  %1162 = vmatprep.subr.bf16.mxu0 %v590
  %1163 = vmatpush1.bf16.msra.mxu0 %v589
  %1164 = vmatprep.subr.bf16.mxu0 %v594
  %1165 = vmatpush1.bf16.msra.mxu0 %v593
  %1166 = vmatprep.subr.bf16.mxu0 %v598
  %1167 = vmatpush1.bf16.msra.mxu0 %v597
  %1168 = vmatprep.subr.bf16.mxu0 %v602
  %1169 = vmatpush1.bf16.msra.mxu0 %v601
  %1170 = vmatprep.subr.bf16.mxu0 %v606
  %1171 = vmatpush1.bf16.msra.mxu0 %v605
  %1172 = vmatprep.subr.bf16.mxu0 %v610
  %1173 = vmatpush1.bf16.msra.mxu0 %v609
  %1174 = vmatprep.subr.bf16.mxu0 %v614
  %1175 = vmatpush1.bf16.msra.mxu0 %v613
  %1176 = vmatprep.subr.bf16.mxu0 0
  %1177 = vmatpush1.bf16.msra.mxu0 0
  %1178 = vmatprep.subr.bf16.mxu0 0
  %1179 = vmatpush1.bf16.msra.mxu0 0
  %1180 = vmatprep.subr.bf16.mxu0 0
  %1181 = vmatpush1.bf16.msra.mxu0 0
  %1182 = vmatprep.subr.bf16.mxu0 0
  %1183 = vmatpush1.bf16.msra.mxu0 0
  %1184 = vmatprep.subr.bf16.mxu0 0
  %1185 = vmatpush1.bf16.msra.mxu0 0
  %1186 = vmatprep.subr.bf16.mxu0 0
  %1187 = vmatpush1.bf16.msra.mxu0 0
  %1188 = vmatprep.subr.bf16.mxu0 0
  %1189 = vmatpush1.bf16.msra.mxu0 0
  %1190 = vmatprep.subr.bf16.mxu0 0
  %1191 = vmatpush1.bf16.msra.mxu0 0
  %1192 = vmatprep.mubr.bf16.mxu0 0
  %1193 = vmatmul.mubr.bf16.gmra.mrb[0].mxu0 %v1118
  %v1194 = vpop.f32.mrb[0].mxu0
  %v1195 = vadd.f32 0.0, %v1194
  %v1196 = vpop.f32.mrb[0].mxu0
  %v1197 = vadd.f32 0.0, %v1196
  %v1198 = vpop.f32.mrb[0].mxu0
  %v1199 = vpop.f32.mrb[0].mxu0
  %1200 = vdwg.mxu0
  %v1201 = vadd.f32 %v1114, %v1154
  %v1202 = vadd.f32 %v1115, %v1156
  %v1203 = vadd.f32 %v1116, %v1195
  %v1204 = vadd.f32 %v1117, %v1197
  %v1205 = vxor.u32 %v1201, 2147483648
  %v1206 = vxor.u32 %v1202, 2147483648
  %v1207 = vxor.u32 %v1203, 2147483648
  %v1208 = vmul.f32 %v1205, 1.442695
  %v1209 = vpow.pop %v1208
  %v1210 = vmul.f32 %v1206, 1.442695
  %v1211 = vpow.pop %v1210
  %v1212 = vmul.f32 %v1207, 1.442695
  %v1213 = vpow.pop %v1212
  %v1214 = vadd.f32 %v1209, 1.0
  %v1215 = vadd.f32 %v1211, 1.0
  %v1216 = vadd.f32 %v1213, 1.0
  %v1217 = vrcp.pop %v1214
  %v1218 = vmul.f32 1.0, %v1217
  %v1219 = vrcp.pop %v1215
  %v1220 = vmul.f32 1.0, %v1219
  %v1221 = vrcp.pop %v1216
  %v1222 = vmul.f32 1.0, %v1221
  %v1223 = vtanh.pop %v1204
  %v1224 = vmul.f32 %v1220, %v1108
  %v1225 = vmul.f32 %v1218, %v1223
  %v1226 = vadd.f32 %v1224, %v1225
  %v1227 = vtanh.pop %v1226
  %v1228 = vmul.f32 %v1222, %v1227
  %s1229 = smul.u32 5, 4
  %s1230 = smul.addr %s1229, 8
  %s1231 = scalar_lea.vmem [#allocation2], %s1230
  %v1232 = vld [vmem:[%s1231] sm:$0xff]
  %v1233 = vld [vmem:[%s1231 + $0x8] sm:$0xff]
  %v1234 = vld [vmem:[%s1231 + $0x10] sm:$0xff]
  %v1235 = vld [vmem:[%s1231 + $0x18] sm:$0xff]
  %v1236 = vpack.c.bf16 %v1228, %v1228
  %1237 = vmatprep.subr.bf16.mxu0 %v584
  %1238 = vmatpush1.bf16.msra.mxu0 %v583
  %1239 = vmatprep.subr.bf16.mxu0 %v588
  %1240 = vmatpush1.bf16.msra.mxu0 %v587
  %1241 = vmatprep.subr.bf16.mxu0 %v592
  %1242 = vmatpush1.bf16.msra.mxu0 %v591
  %1243 = vmatprep.subr.bf16.mxu0 %v596
  %1244 = vmatpush1.bf16.msra.mxu0 %v595
  %1245 = vmatprep.subr.bf16.mxu0 %v600
  %1246 = vmatpush1.bf16.msra.mxu0 %v599
  %1247 = vmatprep.subr.bf16.mxu0 %v604
  %1248 = vmatpush1.bf16.msra.mxu0 %v603
  %1249 = vmatprep.subr.bf16.mxu0 %v608
  %1250 = vmatpush1.bf16.msra.mxu0 %v607
  %1251 = vmatprep.subr.bf16.mxu0 %v612
  %1252 = vmatpush1.bf16.msra.mxu0 %v611
  %1253 = vmatprep.subr.bf16.mxu0 0
  %1254 = vmatpush1.bf16.msra.mxu0 0
  %1255 = vmatprep.subr.bf16.mxu0 0
  %1256 = vmatpush1.bf16.msra.mxu0 0
  %1257 = vmatprep.subr.bf16.mxu0 0
  %1258 = vmatpush1.bf16.msra.mxu0 0
  %1259 = vmatprep.subr.bf16.mxu0 0
  %1260 = vmatpush1.bf16.msra.mxu0 0
  %1261 = vmatprep.subr.bf16.mxu0 0
  %1262 = vmatpush1.bf16.msra.mxu0 0
  %1263 = vmatprep.subr.bf16.mxu0 0
  %1264 = vmatpush1.bf16.msra.mxu0 0
  %1265 = vmatprep.subr.bf16.mxu0 0
  %1266 = vmatpush1.bf16.msra.mxu0 0
  %1267 = vmatprep.subr.bf16.mxu0 0
  %1268 = vmatpush1.bf16.msra.mxu0 0
  %1269 = vmatprep.mubr.bf16.mxu0 0
  %1270 = vmatmul.mubr.bf16.gmra.mrb[0].mxu0 %v1236
  %v1271 = vpop.f32.mrb[0].mxu0
  %v1272 = vadd.f32 0.0, %v1271
  %v1273 = vpop.f32.mrb[0].mxu0
  %v1274 = vadd.f32 0.0, %v1273
  %v1275 = vpop.f32.mrb[0].mxu0
  %v1276 = vpop.f32.mrb[0].mxu0
  %1277 = vdwg.mxu0
  %1278 = vmatprep.subr.bf16.mxu0 %v586
  %1279 = vmatpush1.bf16.msra.mxu0 %v585
  %1280 = vmatprep.subr.bf16.mxu0 %v590
  %1281 = vmatpush1.bf16.msra.mxu0 %v589
  %1282 = vmatprep.subr.bf16.mxu0 %v594
  %1283 = vmatpush1.bf16.msra.mxu0 %v593
  %1284 = vmatprep.subr.bf16.mxu0 %v598
  %1285 = vmatpush1.bf16.msra.mxu0 %v597
  %1286 = vmatprep.subr.bf16.mxu0 %v602
  %1287 = vmatpush1.bf16.msra.mxu0 %v601
  %1288 = vmatprep.subr.bf16.mxu0 %v606
  %1289 = vmatpush1.bf16.msra.mxu0 %v605
  %1290 = vmatprep.subr.bf16.mxu0 %v610
  %1291 = vmatpush1.bf16.msra.mxu0 %v609
  %1292 = vmatprep.subr.bf16.mxu0 %v614
  %1293 = vmatpush1.bf16.msra.mxu0 %v613
  %1294 = vmatprep.subr.bf16.mxu0 0
  %1295 = vmatpush1.bf16.msra.mxu0 0
  %1296 = vmatprep.subr.bf16.mxu0 0
  %1297 = vmatpush1.bf16.msra.mxu0 0
  %1298 = vmatprep.subr.bf16.mxu0 0
  %1299 = vmatpush1.bf16.msra.mxu0 0
  %1300 = vmatprep.subr.bf16.mxu0 0
  %1301 = vmatpush1.bf16.msra.mxu0 0
  %1302 = vmatprep.subr.bf16.mxu0 0
  %1303 = vmatpush1.bf16.msra.mxu0 0
  %1304 = vmatprep.subr.bf16.mxu0 0
  %1305 = vmatpush1.bf16.msra.mxu0 0
  %1306 = vmatprep.subr.bf16.mxu0 0
  %1307 = vmatpush1.bf16.msra.mxu0 0
  %1308 = vmatprep.subr.bf16.mxu0 0
  %1309 = vmatpush1.bf16.msra.mxu0 0
  %1310 = vmatprep.mubr.bf16.mxu0 0
  %1311 = vmatmul.mubr.bf16.gmra.mrb[0].mxu0 %v1236
  %v1312 = vpop.f32.mrb[0].mxu0
  %v1313 = vadd.f32 0.0, %v1312
  %v1314 = vpop.f32.mrb[0].mxu0
  %v1315 = vadd.f32 0.0, %v1314
  %v1316 = vpop.f32.mrb[0].mxu0
  %v1317 = vpop.f32.mrb[0].mxu0
  %1318 = vdwg.mxu0
  %v1319 = vadd.f32 %v1232, %v1272
  %v1320 = vadd.f32 %v1233, %v1274
  %v1321 = vadd.f32 %v1234, %v1313
  %v1322 = vadd.f32 %v1235, %v1315
  %v1323 = vxor.u32 %v1319, 2147483648
  %v1324 = vxor.u32 %v1320, 2147483648
  %v1325 = vxor.u32 %v1321, 2147483648
  %v1326 = vmul.f32 %v1323, 1.442695
  %v1327 = vpow.pop %v1326
  %v1328 = vmul.f32 %v1324, 1.442695
  %v1329 = vpow.pop %v1328
  %v1330 = vmul.f32 %v1325, 1.442695
  %v1331 = vpow.pop %v1330
  %v1332 = vadd.f32 %v1327, 1.0
  %v1333 = vadd.f32 %v1329, 1.0
  %v1334 = vadd.f32 %v1331, 1.0
  %v1335 = vrcp.pop %v1332
  %v1336 = vmul.f32 1.0, %v1335
  %v1337 = vrcp.pop %v1333
  %v1338 = vmul.f32 1.0, %v1337
  %v1339 = vrcp.pop %v1334
  %v1340 = vmul.f32 1.0, %v1339
  %v1341 = vtanh.pop %v1322
  %v1342 = vmul.f32 %v1338, %v1226
  %v1343 = vmul.f32 %v1336, %v1341
  %v1344 = vadd.f32 %v1342, %v1343
  %v1345 = vtanh.pop %v1344
  %v1346 = vmul.f32 %v1340, %v1345
  %s1347 = smul.u32 6, 4
  %s1348 = smul.addr %s1347, 8
  %s1349 = scalar_lea.vmem [#allocation2], %s1348
  %v1350 = vld [vmem:[%s1349] sm:$0xff]
  %v1351 = vld [vmem:[%s1349 + $0x8] sm:$0xff]
  %v1352 = vld [vmem:[%s1349 + $0x10] sm:$0xff]
  %v1353 = vld [vmem:[%s1349 + $0x18] sm:$0xff]
  %v1354 = vpack.c.bf16 %v1346, %v1346
  %1355 = vmatprep.subr.bf16.mxu0 %v584
  %1356 = vmatpush1.bf16.msra.mxu0 %v583
  %1357 = vmatprep.subr.bf16.mxu0 %v588
  %1358 = vmatpush1.bf16.msra.mxu0 %v587
  %1359 = vmatprep.subr.bf16.mxu0 %v592
  %1360 = vmatpush1.bf16.msra.mxu0 %v591
  %1361 = vmatprep.subr.bf16.mxu0 %v596
  %1362 = vmatpush1.bf16.msra.mxu0 %v595
  %1363 = vmatprep.subr.bf16.mxu0 %v600
  %1364 = vmatpush1.bf16.msra.mxu0 %v599
  %1365 = vmatprep.subr.bf16.mxu0 %v604
  %1366 = vmatpush1.bf16.msra.mxu0 %v603
  %1367 = vmatprep.subr.bf16.mxu0 %v608
  %1368 = vmatpush1.bf16.msra.mxu0 %v607
  %1369 = vmatprep.subr.bf16.mxu0 %v612
  %1370 = vmatpush1.bf16.msra.mxu0 %v611
  %1371 = vmatprep.subr.bf16.mxu0 0
  %1372 = vmatpush1.bf16.msra.mxu0 0
  %1373 = vmatprep.subr.bf16.mxu0 0
  %1374 = vmatpush1.bf16.msra.mxu0 0
  %1375 = vmatprep.subr.bf16.mxu0 0
  %1376 = vmatpush1.bf16.msra.mxu0 0
  %1377 = vmatprep.subr.bf16.mxu0 0
  %1378 = vmatpush1.bf16.msra.mxu0 0
  %1379 = vmatprep.subr.bf16.mxu0 0
  %1380 = vmatpush1.bf16.msra.mxu0 0
  %1381 = vmatprep.subr.bf16.mxu0 0
  %1382 = vmatpush1.bf16.msra.mxu0 0
  %1383 = vmatprep.subr.bf16.mxu0 0
  %1384 = vmatpush1.bf16.msra.mxu0 0
  %1385 = vmatprep.subr.bf16.mxu0 0
  %1386 = vmatpush1.bf16.msra.mxu0 0
  %1387 = vmatprep.mubr.bf16.mxu0 0
  %1388 = vmatmul.mubr.bf16.gmra.mrb[0].mxu0 %v1354
  %v1389 = vpop.f32.mrb[0].mxu0
  %v1390 = vadd.f32 0.0, %v1389
  %v1391 = vpop.f32.mrb[0].mxu0
  %v1392 = vadd.f32 0.0, %v1391
  %v1393 = vpop.f32.mrb[0].mxu0
  %v1394 = vpop.f32.mrb[0].mxu0
  %1395 = vdwg.mxu0
  %1396 = vmatprep.subr.bf16.mxu0 %v586
  %1397 = vmatpush1.bf16.msra.mxu0 %v585
  %1398 = vmatprep.subr.bf16.mxu0 %v590
  %1399 = vmatpush1.bf16.msra.mxu0 %v589
  %1400 = vmatprep.subr.bf16.mxu0 %v594
  %1401 = vmatpush1.bf16.msra.mxu0 %v593
  %1402 = vmatprep.subr.bf16.mxu0 %v598
  %1403 = vmatpush1.bf16.msra.mxu0 %v597
  %1404 = vmatprep.subr.bf16.mxu0 %v602
  %1405 = vmatpush1.bf16.msra.mxu0 %v601
  %1406 = vmatprep.subr.bf16.mxu0 %v606
  %1407 = vmatpush1.bf16.msra.mxu0 %v605
  %1408 = vmatprep.subr.bf16.mxu0 %v610
  %1409 = vmatpush1.bf16.msra.mxu0 %v609
  %1410 = vmatprep.subr.bf16.mxu0 %v614
  %1411 = vmatpush1.bf16.msra.mxu0 %v613
  %1412 = vmatprep.subr.bf16.mxu0 0
  %1413 = vmatpush1.bf16.msra.mxu0 0
  %1414 = vmatprep.subr.bf16.mxu0 0
  %1415 = vmatpush1.bf16.msra.mxu0 0
  %1416 = vmatprep.subr.bf16.mxu0 0
  %1417 = vmatpush1.bf16.msra.mxu0 0
  %1418 = vmatprep.subr.bf16.mxu0 0
  %1419 = vmatpush1.bf16.msra.mxu0 0
  %1420 = vmatprep.subr.bf16.mxu0 0
  %1421 = vmatpush1.bf16.msra.mxu0 0
  %1422 = vmatprep.subr.bf16.mxu0 0
  %1423 = vmatpush1.bf16.msra.mxu0 0
  %1424 = vmatprep.subr.bf16.mxu0 0
  %1425 = vmatpush1.bf16.msra.mxu0 0
  %1426 = vmatprep.subr.bf16.mxu0 0
  %1427 = vmatpush1.bf16.msra.mxu0 0
  %1428 = vmatprep.mubr.bf16.mxu0 0
  %1429 = vmatmul.mubr.bf16.gmra.mrb[0].mxu0 %v1354
  %v1430 = vpop.f32.mrb[0].mxu0
  %v1431 = vadd.f32 0.0, %v1430
  %v1432 = vpop.f32.mrb[0].mxu0
  %v1433 = vadd.f32 0.0, %v1432
  %v1434 = vpop.f32.mrb[0].mxu0
  %v1435 = vpop.f32.mrb[0].mxu0
  %1436 = vdwg.mxu0
  %v1437 = vadd.f32 %v1350, %v1390
  %v1438 = vadd.f32 %v1351, %v1392
  %v1439 = vadd.f32 %v1352, %v1431
  %v1440 = vadd.f32 %v1353, %v1433
  %v1441 = vxor.u32 %v1437, 2147483648
  %v1442 = vxor.u32 %v1438, 2147483648
  %v1443 = vxor.u32 %v1439, 2147483648
  %v1444 = vmul.f32 %v1441, 1.442695
  %v1445 = vpow.pop %v1444
  %v1446 = vmul.f32 %v1442, 1.442695
  %v1447 = vpow.pop %v1446
  %v1448 = vmul.f32 %v1443, 1.442695
  %v1449 = vpow.pop %v1448
  %v1450 = vadd.f32 %v1445, 1.0
  %v1451 = vadd.f32 %v1447, 1.0
  %v1452 = vadd.f32 %v1449, 1.0
  %v1453 = vrcp.pop %v1450
  %v1454 = vmul.f32 1.0, %v1453
  %v1455 = vrcp.pop %v1451
  %v1456 = vmul.f32 1.0, %v1455
  %v1457 = vrcp.pop %v1452
  %v1458 = vmul.f32 1.0, %v1457
  %v1459 = vtanh.pop %v1440
  %v1460 = vmul.f32 %v1456, %v1344
  %v1461 = vmul.f32 %v1454, %v1459
  %v1462 = vadd.f32 %v1460, %v1461
  %v1463 = vtanh.pop %v1462
  %v1464 = vmul.f32 %v1458, %v1463
  %s1465 = smul.u32 7, 4
  %s1466 = smul.addr %s1465, 8
  %s1467 = scalar_lea.vmem [#allocation2], %s1466
  %v1468 = vld [vmem:[%s1467] sm:$0xff]
  %v1469 = vld [vmem:[%s1467 + $0x8] sm:$0xff]
  %v1470 = vld [vmem:[%s1467 + $0x10] sm:$0xff]
  %v1471 = vld [vmem:[%s1467 + $0x18] sm:$0xff]
  %v1472 = vpack.c.bf16 %v1464, %v1464
  %1473 = vmatprep.subr.bf16.mxu0 %v584
  %1474 = vmatpush1.bf16.msra.mxu0 %v583
  %1475 = vmatprep.subr.bf16.mxu0 %v588
  %1476 = vmatpush1.bf16.msra.mxu0 %v587
  %1477 = vmatprep.subr.bf16.mxu0 %v592
  %1478 = vmatpush1.bf16.msra.mxu0 %v591
  %1479 = vmatprep.subr.bf16.mxu0 %v596
  %1480 = vmatpush1.bf16.msra.mxu0 %v595
  %1481 = vmatprep.subr.bf16.mxu0 %v600
  %1482 = vmatpush1.bf16.msra.mxu0 %v599
  %1483 = vmatprep.subr.bf16.mxu0 %v604
  %1484 = vmatpush1.bf16.msra.mxu0 %v603
  %1485 = vmatprep.subr.bf16.mxu0 %v608
  %1486 = vmatpush1.bf16.msra.mxu0 %v607
  %1487 = vmatprep.subr.bf16.mxu0 %v612
  %1488 = vmatpush1.bf16.msra.mxu0 %v611
  %1489 = vmatprep.subr.bf16.mxu0 0
  %1490 = vmatpush1.bf16.msra.mxu0 0
  %1491 = vmatprep.subr.bf16.mxu0 0
  %1492 = vmatpush1.bf16.msra.mxu0 0
  %1493 = vmatprep.subr.bf16.mxu0 0
  %1494 = vmatpush1.bf16.msra.mxu0 0
  %1495 = vmatprep.subr.bf16.mxu0 0
  %1496 = vmatpush1.bf16.msra.mxu0 0
  %1497 = vmatprep.subr.bf16.mxu0 0
  %1498 = vmatpush1.bf16.msra.mxu0 0
  %1499 = vmatprep.subr.bf16.mxu0 0
  %1500 = vmatpush1.bf16.msra.mxu0 0
  %1501 = vmatprep.subr.bf16.mxu0 0
  %1502 = vmatpush1.bf16.msra.mxu0 0
  %1503 = vmatprep.subr.bf16.mxu0 0
  %1504 = vmatpush1.bf16.msra.mxu0 0
  %1505 = vmatprep.mubr.bf16.mxu0 0
  %1506 = vmatmul.mubr.bf16.gmra.mrb[0].mxu0 %v1472
  %v1507 = vpop.f32.mrb[0].mxu0
  %v1508 = vadd.f32 0.0, %v1507
  %v1509 = vpop.f32.mrb[0].mxu0
  %v1510 = vadd.f32 0.0, %v1509
  %v1511 = vpop.f32.mrb[0].mxu0
  %v1512 = vpop.f32.mrb[0].mxu0
  %1513 = vdwg.mxu0
  %1514 = vmatprep.subr.bf16.mxu0 %v586
  %1515 = vmatpush1.bf16.msra.mxu0 %v585
  %1516 = vmatprep.subr.bf16.mxu0 %v590
  %1517 = vmatpush1.bf16.msra.mxu0 %v589
  %1518 = vmatprep.subr.bf16.mxu0 %v594
  %1519 = vmatpush1.bf16.msra.mxu0 %v593
  %1520 = vmatprep.subr.bf16.mxu0 %v598
  %1521 = vmatpush1.bf16.msra.mxu0 %v597
  %1522 = vmatprep.subr.bf16.mxu0 %v602
  %1523 = vmatpush1.bf16.msra.mxu0 %v601
  %1524 = vmatprep.subr.bf16.mxu0 %v606
  %1525 = vmatpush1.bf16.msra.mxu0 %v605
  %1526 = vmatprep.subr.bf16.mxu0 %v610
  %1527 = vmatpush1.bf16.msra.mxu0 %v609
  %1528 = vmatprep.subr.bf16.mxu0 %v614
  %1529 = vmatpush1.bf16.msra.mxu0 %v613
  %1530 = vmatprep.subr.bf16.mxu0 0
  %1531 = vmatpush1.bf16.msra.mxu0 0
  %1532 = vmatprep.subr.bf16.mxu0 0
  %1533 = vmatpush1.bf16.msra.mxu0 0
  %1534 = vmatprep.subr.bf16.mxu0 0
  %1535 = vmatpush1.bf16.msra.mxu0 0
  %1536 = vmatprep.subr.bf16.mxu0 0
  %1537 = vmatpush1.bf16.msra.mxu0 0
  %1538 = vmatprep.subr.bf16.mxu0 0
  %1539 = vmatpush1.bf16.msra.mxu0 0
  %1540 = vmatprep.subr.bf16.mxu0 0
  %1541 = vmatpush1.bf16.msra.mxu0 0
  %1542 = vmatprep.subr.bf16.mxu0 0
  %1543 = vmatpush1.bf16.msra.mxu0 0
  %1544 = vmatprep.subr.bf16.mxu0 0
  %1545 = vmatpush1.bf16.msra.mxu0 0
  %1546 = vmatprep.mubr.bf16.mxu0 0
  %1547 = vmatmul.mubr.bf16.gmra.mrb[0].mxu0 %v1472
  %v1548 = vpop.f32.mrb[0].mxu0
  %v1549 = vadd.f32 0.0, %v1548
  %v1550 = vpop.f32.mrb[0].mxu0
  %v1551 = vadd.f32 0.0, %v1550
  %v1552 = vpop.f32.mrb[0].mxu0
  %v1553 = vpop.f32.mrb[0].mxu0
  %1554 = vdwg.mxu0
  %v1555 = vadd.f32 %v1468, %v1508
  %v1556 = vadd.f32 %v1469, %v1510
  %v1557 = vadd.f32 %v1470, %v1549
  %v1558 = vadd.f32 %v1471, %v1551
  %v1559 = vxor.u32 %v1555, 2147483648
  %v1560 = vxor.u32 %v1556, 2147483648
  %v1561 = vxor.u32 %v1557, 2147483648
  %v1562 = vmul.f32 %v1559, 1.442695
  %v1563 = vpow.pop %v1562
  %v1564 = vmul.f32 %v1560, 1.442695
  %v1565 = vpow.pop %v1564
  %v1566 = vmul.f32 %v1561, 1.442695
  %v1567 = vpow.pop %v1566
  %v1568 = vadd.f32 %v1563, 1.0
  %v1569 = vadd.f32 %v1565, 1.0
  %v1570 = vadd.f32 %v1567, 1.0
  %v1571 = vrcp.pop %v1568
  %v1572 = vmul.f32 1.0, %v1571
  %v1573 = vrcp.pop %v1569
  %v1574 = vmul.f32 1.0, %v1573
  %v1575 = vrcp.pop %v1570
  %v1576 = vmul.f32 1.0, %v1575
  %v1577 = vtanh.pop %v1558
  %v1578 = vmul.f32 %v1574, %v1462
  %v1579 = vmul.f32 %v1572, %v1577
  %v1580 = vadd.f32 %v1578, %v1579
  %v1581 = vtanh.pop %v1580
  %v1582 = vmul.f32 %v1576, %v1581
  %v1583 = vpack.c.bf16 %v1582, %v1582
  %v1584 = vld [vmem:[%s4] sm:$0xf]
  %v1585 = vld [vmem:[%s4 + $0x4] sm:$0xf]
  %v1586 = vld [vmem:[%s4 + $0x8] sm:$0xf]
  %v1587 = vld [vmem:[%s4 + $0xc] sm:$0xf]
  %v1588 = vld [vmem:[%s4 + $0x10] sm:$0xf]
  %v1589 = vld [vmem:[%s4 + $0x14] sm:$0xf]
  %v1590 = vld [vmem:[%s4 + $0x18] sm:$0xf]
  %v1591 = vld [vmem:[%s4 + $0x1c] sm:$0xf]
  %v1592 = vld [vmem:[%s4 + $0x20] sm:$0xf]
  %v1593 = vld [vmem:[%s4 + $0x24] sm:$0xf]
  %v1594 = vld [vmem:[%s4 + $0x28] sm:$0xf]
  %v1595 = vld [vmem:[%s4 + $0x2c] sm:$0xf]
  %v1596 = vld [vmem:[%s4 + $0x30] sm:$0xf]
  %v1597 = vld [vmem:[%s4 + $0x34] sm:$0xf]
  %v1598 = vld [vmem:[%s4 + $0x38] sm:$0xf]
  %v1599 = vld [vmem:[%s4 + $0x3c] sm:$0xf]
  %v1600 = vld [vmem:[%s5] sm:$0x1]
  %v1602 = vlaneseq
  %v1603 = vshrl.u32 %v1602, 7
  %v1604 = vsub.s32 0, %v1603
  %v1605 = vrot.slane %v1600, %v1604
  %v1623 = vunpack.c.l.b16 %v1584
  %v1624 = vunpack.c.l.b16 %v1585
  %v1625 = vunpack.c.l.b16 %v1586
  %v1626 = vunpack.c.l.b16 %v1587
  %v1627 = vunpack.c.l.b16 %v1588
  %v1628 = vunpack.c.l.b16 %v1589
  %v1629 = vunpack.c.l.b16 %v1590
  %v1630 = vunpack.c.l.b16 %v1591
  %v1631 = vunpack.c.l.b16 %v1592
  %v1632 = vunpack.c.l.b16 %v1593
  %v1633 = vunpack.c.l.b16 %v1594
  %v1634 = vunpack.c.l.b16 %v1595
  %v1635 = vunpack.c.l.b16 %v1596
  %v1636 = vunpack.c.l.b16 %v1597
  %v1637 = vunpack.c.l.b16 %v1598
  %v1638 = vunpack.c.l.b16 %v1599
  %v1639 = vpack.c.b16 %v1624, %v1623
  %v1640 = vpack.c.b16 %v1626, %v1625
  %v1641 = vpack.c.b16 %v1628, %v1627
  %v1642 = vpack.c.b16 %v1630, %v1629
  %v1643 = vpack.c.b16 %v1632, %v1631
  %v1644 = vpack.c.b16 %v1634, %v1633
  %v1645 = vpack.c.b16 %v1636, %v1635
  %v1646 = vpack.c.b16 %v1638, %v1637
  %1655 = vmatprep.subr.bf16.mxu0 0
  %1656 = vmatpush1.bf16.msra.mxu0 %v1639
  %1657 = vmatprep.subr.bf16.mxu0 0
  %1658 = vmatpush1.bf16.msra.mxu0 %v1640
  %1659 = vmatprep.subr.bf16.mxu0 0
  %1660 = vmatpush1.bf16.msra.mxu0 %v1641
  %1661 = vmatprep.subr.bf16.mxu0 0
  %1662 = vmatpush1.bf16.msra.mxu0 %v1642
  %1663 = vmatprep.subr.bf16.mxu0 0
  %1664 = vmatpush1.bf16.msra.mxu0 %v1643
  %1665 = vmatprep.subr.bf16.mxu0 0
  %1666 = vmatpush1.bf16.msra.mxu0 %v1644
  %1667 = vmatprep.subr.bf16.mxu0 0
  %1668 = vmatpush1.bf16.msra.mxu0 %v1645
  %1669 = vmatprep.subr.bf16.mxu0 0
  %1670 = vmatpush1.bf16.msra.mxu0 %v1646
  %1671 = vmatprep.subr.bf16.mxu0 0
  %1672 = vmatpush1.bf16.msra.mxu0 0
  %1673 = vmatprep.subr.bf16.mxu0 0
  %1674 = vmatpush1.bf16.msra.mxu0 0
  %1675 = vmatprep.subr.bf16.mxu0 0
  %1676 = vmatpush1.bf16.msra.mxu0 0
  %1677 = vmatprep.subr.bf16.mxu0 0
  %1678 = vmatpush1.bf16.msra.mxu0 0
  %1679 = vmatprep.subr.bf16.mxu0 0
  %1680 = vmatpush1.bf16.msra.mxu0 0
  %1681 = vmatprep.subr.bf16.mxu0 0
  %1682 = vmatpush1.bf16.msra.mxu0 0
  %1683 = vmatprep.subr.bf16.mxu0 0
  %1684 = vmatpush1.bf16.msra.mxu0 0
  %1685 = vmatprep.subr.bf16.mxu0 0
  %1686 = vmatpush1.bf16.msra.mxu0 0
  %1687 = vmatprep.mubr.bf16.mxu0 0
  %1688 = vmatmul.mubr.bf16.gmra.mrb[0].mxu0 %v1583
  %v1689 = vpop.f32.mrb[0].mxu0
  %v1690 = vadd.f32 %v1605, %v1689
  %v1691 = vpop.f32.mrb[0].mxu0
  %v1692 = vpop.f32.mrb[0].mxu0
  %v1693 = vpop.f32.mrb[0].mxu0
  %1694 = vdwg.mxu0
  %1695 = vst [vmem:[%s6] sm:$0xff] %v1690
  // Predicated region
  $region26: #{rnn_forward.1} parent=0 // pred_check
    _
  $region27: #{rnn_forward.1} parent=0 // pred_check_branch
    %1697 = sbr.rel (0) target = $region29
  $region28: #{rnn_forward.1} parent=0 // pred_region
    _
  $region29: #{rnn_forward.1} parent=0 // pred_fallthru
    _
  // Predicated region
  $region30: #{rnn_forward.1} parent=0 // pred_check
    _
  $region31: #{rnn_forward.1} parent=0 // pred_check_branch
    %1699 = sbr.rel (0) target = $region33
  $region32: #{rnn_forward.1} parent=0 // pred_region
    _
  $region33: #{rnn_forward.1} parent=0 // pred_fallthru
    _

</llo_original>
